<compile_context>
chip_gen: v7x
topology: tpu7x:2x2x1
jax: 0.10.0
libtpu: 0.0.40
codegen_flags: <defaults>
</compile_context>

<pallas_src>
from functools import partial

import jax
import jax.numpy as jnp
from jax.experimental import pallas as pl
from jax.experimental.pallas import tpu as pltpu


def _round_up(x, m):
    return (x + m - 1) // m * m


def _pick_batch_block(n, cap=8):
    """Largest divisor of n (<= cap); prefer leaving an even grid for v7x 2-TC."""
    divisors = [d for d in range(1, min(n, cap) + 1) if n % d == 0]
    for d in sorted(divisors, reverse=True):
        if d >= 2 and (n // d) % 2 == 0:
            return d
    return max(divisors)


def _conv_block_kernel(*refs, num_conv, B_blk, H, W, KH, KW, Wp, Lv, Lvp, Lsrc,
                       eps, neg_slope):
    """Fused ConvBlock for a block of B_blk samples.

    refs = (x, w_1, gb_1, ..., w_n, gb_n, mask, out,
            patch_1, ..., patch_n, pad_2, ..., pad_n)

      x        : (B_blk, Cp_1, Lsrc)  fully padded, width-flattened input slab
      w_i      : (Cout_i, KH*KW*Cp_i) bf16 conv weights, (kh, kw, cin) minor order
      gb_i     : (Cout_i, 2)          col 0 = gamma, col 1 = beta (f32)
      mask     : (1, Lvp)             1.0 at valid output columns, else 0.0
      out      : (B_blk, Cout_n, Lvp) lane-dense (128-multiple) output slab
      patch_i  : VMEM (KH*KW*Cp_i, B_blk*Lvp) bf16   im2col slab for layer i
      pad_i    : VMEM (B_blk, Cp_i, Lsrc) f32        padded input of layer i (i>1)
    """
    f32 = jnp.float32
    ph, pw = KH // 2, KW // 2
    off = ph * Wp + pw                      # flat offset of padded position (ph, pw)
    inv_cnt = 1.0 / float(H * W)            # valid spatial positions per sample

    x_ref = refs[0]
    wgb_refs = refs[1:1 + 2 * num_conv]
    mask_ref = refs[1 + 2 * num_conv]
    o_ref = refs[2 + 2 * num_conv]
    scratch = refs[3 + 2 * num_conv:]
    patch_refs = scratch[:num_conv]
    pad_refs = scratch[num_conv:]

    mask = mask_ref[...].astype(f32)        # (1, Lvp)

    for i in range(num_conv):
        w_ref, gb_ref = wgb_refs[2 * i], wgb_refs[2 * i + 1]
        patch_ref = patch_refs[i]
        src_ref = x_ref if i == 0 else pad_refs[i - 1]
        cp = patch_ref.shape[0] // (KH * KW)     # padded input channels (mult of 8)
        last = i == num_conv - 1

        # --- im2col: aligned-destination tap copies ---------------------------
        # dst sublane offset t*cp is a multiple of 8, dst lane offset b*Lvp is a
        # multiple of 128; sources are contiguous lane slices of the padded slab.
        for b in range(B_blk):
            for kh in range(KH):
                for kw in range(KW):
                    t = kh * KW + kw
                    d = kh * Wp + kw
                    patch_ref[t * cp:(t + 1) * cp, b * Lvp:(b + 1) * Lvp] = (
                        src_ref[b, :, d:d + Lvp].astype(patch_ref.dtype))

        # --- one MXU matmul for the whole batch block (bf16 in, f32 acc) ------
        acc = jnp.dot(w_ref[...], patch_ref[...], preferred_element_type=f32)

        gamma = gb_ref[:, 0:1].astype(f32)       # (Cout, 1)
        beta = gb_ref[:, 1:2].astype(f32)

        if not last:
            nxt = pad_refs[i]
            cnxt = nxt.shape[1]
            zero_lo = jnp.zeros((cnxt, off), f32)
            zero_hi = jnp.zeros((cnxt, Lsrc - off - Lvp), f32)

        for b in range(B_blk):
            a = acc[:, b * Lvp:(b + 1) * Lvp]    # this sample's (Cout, Lvp) slab
            # InstanceNorm2d over valid positions (per-sample, per-channel,
            # biased variance, eps inside rsqrt — matches PyTorch), folded into
            # a single FMA via scale/shift.
            am = a * mask
            s1 = jnp.sum(am, axis=1, keepdims=True)
            s2 = jnp.sum(am * a, axis=1, keepdims=True)
            mean = s1 * inv_cnt
            var = s2 * inv_cnt - mean * mean
            scale = gamma * jax.lax.rsqrt(var + eps)
            shift = beta - mean * scale
            y = a * scale + shift
            y = jnp.where(y >= 0, y, neg_slope * y)   # LeakyReLU (f32 VPU math)

            if last:
                # Lane-dense (Cout, Lvp) store; pad columns stripped in wrapper.
                o_ref[b] = y.astype(o_ref.dtype)
            else:
                cout = y.shape[0]
                # Zero only the halo lanes (never touched by the data store).
                nxt[b, :, 0:off] = zero_lo
                nxt[b, :, off + Lvp:Lsrc] = zero_hi
                if cnxt > cout:
                    nxt[b, cout:cnxt, :] = jnp.zeros((cnxt - cout, Lsrc), f32)
                # Masked output drops straight into the padded layout: the
                # mask-zeroed wrap columns become the interior spatial padding.
                nxt[b, 0:cout, off:off + Lvp] = y * mask


def conv_block_forward(x_nchw, params, *, stride=1, eps=1e-5, neg_slope=0.01,
                       max_batch_block=8):
    """ConvBlock.forward: num_conv fused ConvLayers (conv -> InstanceNorm -> LeakyReLU)."""
    if stride != 1:
        # TODO(synk): stride > 1 on the first ConvLayer needs a strided-patch path.
        raise NotImplementedError("fused ConvBlock Pallas kernel supports stride=1 only")

    N, c_in, H, W = x_nchw.shape
    KH, KW = params[0]["w"].shape[:2]
    ph, pw = KH // 2, KW // 2
    Hp, Wp = H + 2 * ph, W + 2 * pw
    Lv = H * Wp                              # real width-flattened length
    Lvp = _round_up(Lv, 128)                 # lane-dense per-sample extent
    max_d = (KH - 1) * Wp + (KW - 1)         # largest tap offset
    Lsrc = _round_up(max_d + Lvp, 128)       # padded source slab length
    num_conv = len(params)
    B_blk = _pick_batch_block(N, max_batch_block)

    couts = [p["w"].shape[3] for p in params]
    cins = [c_in] + couts[:-1]
    cps = [_round_up(c, 8) for c in cins]    # sublane-aligned input channels

    # Fully pad the input once in the wrapper (channels -> mult of 8, SAME halo)
    # and flatten to a lane-dense (N, Cp_1, Lsrc) slab: the kernel does no
    # staging for layer 1.
    xp = jnp.pad(x_nchw, ((0, 0), (0, cps[0] - c_in), (ph, ph), (pw, pw)))
    xp = xp.reshape(N, cps[0], Hp * Wp)
    xp = jnp.pad(xp, ((0, 0), (0, 0), (0, Lsrc - Hp * Wp)))

    operands = []
    in_specs = [pl.BlockSpec((B_blk, cps[0], Lsrc), lambda n: (n, 0, 0))]
    scratch_patch, scratch_pad = [], []
    for i, p in enumerate(params):
        kh_, kw_, ci_, co_ = p["w"].shape
        assert (kh_, kw_, ci_) == (KH, KW, cins[i])
        # (KH, KW, Cin, Cout) -> zero-pad Cin to Cp -> (Cout, KH*KW*Cp), bf16.
        wpad = jnp.pad(p["w"], ((0, 0), (0, 0), (0, cps[i] - ci_), (0, 0)))
        w2d = (jnp.transpose(wpad, (3, 0, 1, 2))
               .reshape(co_, KH * KW * cps[i]).astype(jnp.bfloat16))
        gb = jnp.stack([p["gamma"], p["beta"]], axis=1).astype(jnp.float32)
        # NOTE: p["b"] (conv bias) is intentionally NOT passed: a per-channel
        # bias is exactly cancelled by the InstanceNorm mean subtraction.
        operands += [w2d, gb]
        in_specs += [pl.BlockSpec(w2d.shape, lambda n: (0, 0)),
                     pl.BlockSpec(gb.shape, lambda n: (0, 0))]
        scratch_patch.append(
            pltpu.VMEM((KH * KW * cps[i], B_blk * Lvp), jnp.bfloat16))
        if i + 1 < num_conv:
            scratch_pad.append(pltpu.VMEM((B_blk, cps[i + 1], Lsrc), jnp.float32))
    c_out = couts[-1]

    # Valid-column mask over one sample's lane-padded extent.
    cols = jnp.arange(Lvp)
    mask = ((cols < Lv) & ((cols % Wp) < W)).astype(jnp.float32)[None, :]
    operands.append(mask)
    in_specs.append(pl.BlockSpec((1, Lvp), lambda n: (0, 0)))

    kernel = partial(_conv_block_kernel, num_conv=num_conv, B_blk=B_blk, H=H,
                     W=W, KH=KH, KW=KW, Wp=Wp, Lv=Lv, Lvp=Lvp, Lsrc=Lsrc,
                     eps=eps, neg_slope=neg_slope)

    out_ext = pl.pallas_call(
        kernel,
        out_shape=jax.ShapeDtypeStruct((N, c_out, Lvp), x_nchw.dtype),
        grid_spec=pltpu.PrefetchScalarGridSpec(
            num_scalar_prefetch=0,
            grid=(N // B_blk,),
            in_specs=in_specs,
            out_specs=pl.BlockSpec((B_blk, c_out, Lvp), lambda n: (n, 0, 0)),
            scratch_shapes=scratch_patch + scratch_pad,
        ),
        compiler_params=pltpu.CompilerParams(dimension_semantics=("parallel",)),
    )(xp, *operands)

    # Strip lane padding and width-pad columns: (N, C, Lvp) -> (N, C, H, W).
    return out_ext[:, :, :Lv].reshape(N, c_out, H, Wp)[:, :, :, :W]


def init_conv_block_params(key, num_conv, in_channels, out_channels, kernel_size):
    """Deterministic parameter init (Kaiming-style normal for conv weights)."""
    if isinstance(out_channels, int):
        out_channels = (out_channels,) * num_conv
    params = []
    cin = in_channels
    for i in range(num_conv):
        cout = out_channels[i]
        key, kw_, kb_ = jax.random.split(key, 3)
        fan_in = cin * kernel_size * kernel_size
        w = jax.random.normal(kw_, (kernel_size, kernel_size, cin, cout),
                              jnp.float32) * (2.0 / fan_in) ** 0.5
        b = jax.random.normal(kb_, (cout,), jnp.float32) * 0.01
        params.append({
            "w": w, "b": b,      # b kept for fidelity; cancelled by InstanceNorm
            "gamma": jnp.ones((cout,), jnp.float32),
            "beta": jnp.zeros((cout,), jnp.float32),
        })
        cin = cout
    return params


def _conv_block_reference(x_nchw, params, *, stride=1, eps=1e-5, neg_slope=0.01):
    """Pure-JAX reference of ConvBlock.forward (conv+bias -> InstanceNorm -> LeakyReLU)."""
    y = x_nchw
    for i, p in enumerate(params):
        s = stride if i == 0 else 1
        kh, kw = p["w"].shape[:2]
        y = jax.lax.conv_general_dilated(
            y, p["w"], window_strides=(s, s),
            padding=[(kh // 2, kh // 2), (kw // 2, kw // 2)],
            dimension_numbers=("NCHW", "HWIO", "NCHW"),
            precision=jax.lax.Precision.HIGHEST)
        y = y + p["b"][None, :, None, None]
        mean = jnp.mean(y, axis=(2, 3), keepdims=True)
        var = jnp.mean((y - mean) ** 2, axis=(2, 3), keepdims=True)
        y = (y - mean) * jax.lax.rsqrt(var + eps)
        y = y * p["gamma"][None, :, None, None] + p["beta"][None, :, None, None]
        y = jnp.where(y >= 0, y, neg_slope * y)
    return y


if __name__ == "__main__":
    key = jax.random.PRNGKey(0)
    kx, kp = jax.random.split(key)

    # Small shapes consistent with the module: batch=2, in_channels=4, spatial=16.
    N, C_in, H, W = 2, 4, 16, 16
    num_conv, C_out, ksize, stride = 2, 8, 3, 1

    x = jax.random.normal(kx, (N, C_in, H, W), jnp.float32)   # NCHW, like PyTorch
    params = init_conv_block_params(kp, num_conv, C_in, C_out, ksize)

    out = conv_block_forward(x, params, stride=stride)
    jax.block_until_ready(out)

    assert out.shape == (N, C_out, H // stride, W // stride), out.shape
    assert bool(jnp.all(jnp.isfinite(out)))

    # Sanity check against a pure-JAX f32 reference (tolerance covers bf16 MXU inputs).
    ref = _conv_block_reference(x, params, stride=stride)
    max_err = float(jnp.max(jnp.abs(out - ref)))
    assert max_err < 5e-2, f"max |kernel - reference| = {max_err}"

    print("KERNEL_OK")
</pallas_src>

<mosaic_0001>
module attributes {stable_mosaic.version = 11 : i64} {
  func.func @_conv_block_kernel(%arg0: i32, %arg1: memref<2x8x512xf32, #tpu.memory_space<vmem>>, %arg2: memref<8x72xbf16, #tpu.memory_space<vmem>>, %arg3: memref<8x2xf32, #tpu.memory_space<vmem>>, %arg4: memref<8x72xbf16, #tpu.memory_space<vmem>>, %arg5: memref<8x2xf32, #tpu.memory_space<vmem>>, %arg6: memref<1x384xf32, #tpu.memory_space<vmem>>, %arg7: memref<2x8x384xf32, #tpu.memory_space<vmem>>, %arg8: memref<72x768xbf16, #tpu.memory_space<vmem>>, %arg9: memref<72x768xbf16, #tpu.memory_space<vmem>>, %arg10: memref<2x8x512xf32, #tpu.memory_space<vmem>>) attributes {dimension_semantics = [#tpu.dimension_semantics<parallel>], iteration_bounds = array<i64: 1>, scalar_prefetch = 0 : i64, scratch_operands = 3 : i64, tpu.core_type = #tpu.core_type<tc>, window_params = [{transform_indices = @transform_0, window_bounds = array<i64: 2, 8, 512>}, {pipeline_mode = #tpu.pipeline_mode<synchronous>, transform_indices = @transform_1, window_bounds = array<i64: 8, 72>}, {pipeline_mode = #tpu.pipeline_mode<synchronous>, transform_indices = @transform_2, window_bounds = array<i64: 8, 2>}, {pipeline_mode = #tpu.pipeline_mode<synchronous>, transform_indices = @transform_3, window_bounds = array<i64: 8, 72>}, {pipeline_mode = #tpu.pipeline_mode<synchronous>, transform_indices = @transform_4, window_bounds = array<i64: 8, 2>}, {pipeline_mode = #tpu.pipeline_mode<synchronous>, transform_indices = @transform_5, window_bounds = array<i64: 1, 384>}, {transform_indices = @transform_6, window_bounds = array<i64: 2, 8, 384>}]} {
    %c0 = arith.constant 0 : index
    %c0_0 = arith.constant 0 : index
    %0 = vector.load %arg6[%c0, %c0_0] : memref<1x384xf32, #tpu.memory_space<vmem>>, vector<1x384xf32>
    %c0_1 = arith.constant 0 : index
    %c0_2 = arith.constant 0 : index
    %c0_3 = arith.constant 0 : index
    %1 = vector.load %arg1[%c0_1, %c0_2, %c0_3] : memref<2x8x512xf32, #tpu.memory_space<vmem>>, vector<1x8x384xf32>
    %2 = vector.shape_cast %1 : vector<1x8x384xf32> to vector<8x384xf32>
    %3 = arith.truncf %2 : vector<8x384xf32> to vector<8x384xbf16>
    %c0_4 = arith.constant 0 : index
    %c0_5 = arith.constant 0 : index
    %4 = vector.load %arg8[%c0_4, %c0_5] : memref<72x768xbf16, #tpu.memory_space<vmem>>, vector<8x384xbf16>
    tpu.vector_store %arg8[%c0_4, %c0_5], %3 {strides = array<i32>} : memref<72x768xbf16, #tpu.memory_space<vmem>>, vector<8x384xbf16>,
    %c0_6 = arith.constant 0 : index
    %c0_7 = arith.constant 0 : index
    %c1 = arith.constant 1 : index
    %5 = vector.load %arg1[%c0_6, %c0_7, %c1] : memref<2x8x512xf32, #tpu.memory_space<vmem>>, vector<1x8x384xf32>
    %6 = vector.shape_cast %5 : vector<1x8x384xf32> to vector<8x384xf32>
    %7 = arith.truncf %6 : vector<8x384xf32> to vector<8x384xbf16>
    %c8 = arith.constant 8 : index
    %c0_8 = arith.constant 0 : index
    %8 = vector.load %arg8[%c8, %c0_8] : memref<72x768xbf16, #tpu.memory_space<vmem>>, vector<8x384xbf16>
    tpu.vector_store %arg8[%c8, %c0_8], %7 {strides = array<i32>} : memref<72x768xbf16, #tpu.memory_space<vmem>>, vector<8x384xbf16>,
    %c0_9 = arith.constant 0 : index
    %c0_10 = arith.constant 0 : index
    %c2 = arith.constant 2 : index
    %9 = vector.load %arg1[%c0_9, %c0_10, %c2] : memref<2x8x512xf32, #tpu.memory_space<vmem>>, vector<1x8x384xf32>
    %10 = vector.shape_cast %9 : vector<1x8x384xf32> to vector<8x384xf32>
    %11 = arith.truncf %10 : vector<8x384xf32> to vector<8x384xbf16>
    %c16 = arith.constant 16 : index
    %c0_11 = arith.constant 0 : index
    %12 = vector.load %arg8[%c16, %c0_11] : memref<72x768xbf16, #tpu.memory_space<vmem>>, vector<8x384xbf16>
    tpu.vector_store %arg8[%c16, %c0_11], %11 {strides = array<i32>} : memref<72x768xbf16, #tpu.memory_space<vmem>>, vector<8x384xbf16>,
    %c0_12 = arith.constant 0 : index
    %c0_13 = arith.constant 0 : index
    %c18 = arith.constant 18 : index
    %13 = vector.load %arg1[%c0_12, %c0_13, %c18] : memref<2x8x512xf32, #tpu.memory_space<vmem>>, vector<1x8x384xf32>
    %14 = vector.shape_cast %13 : vector<1x8x384xf32> to vector<8x384xf32>
    %15 = arith.truncf %14 : vector<8x384xf32> to vector<8x384xbf16>
    %c24 = arith.constant 24 : index
    %c0_14 = arith.constant 0 : index
    %16 = vector.load %arg8[%c24, %c0_14] : memref<72x768xbf16, #tpu.memory_space<vmem>>, vector<8x384xbf16>
    tpu.vector_store %arg8[%c24, %c0_14], %15 {strides = array<i32>} : memref<72x768xbf16, #tpu.memory_space<vmem>>, vector<8x384xbf16>,
    %c0_15 = arith.constant 0 : index
    %c0_16 = arith.constant 0 : index
    %c19 = arith.constant 19 : index
    %17 = vector.load %arg1[%c0_15, %c0_16, %c19] : memref<2x8x512xf32, #tpu.memory_space<vmem>>, vector<1x8x384xf32>
    %18 = vector.shape_cast %17 : vector<1x8x384xf32> to vector<8x384xf32>
    %19 = arith.truncf %18 : vector<8x384xf32> to vector<8x384xbf16>
    %c32 = arith.constant 32 : index
    %c0_17 = arith.constant 0 : index
    %20 = vector.load %arg8[%c32, %c0_17] : memref<72x768xbf16, #tpu.memory_space<vmem>>, vector<8x384xbf16>
    tpu.vector_store %arg8[%c32, %c0_17], %19 {strides = array<i32>} : memref<72x768xbf16, #tpu.memory_space<vmem>>, vector<8x384xbf16>,
    %c0_18 = arith.constant 0 : index
    %c0_19 = arith.constant 0 : index
    %c20 = arith.constant 20 : index
    %21 = vector.load %arg1[%c0_18, %c0_19, %c20] : memref<2x8x512xf32, #tpu.memory_space<vmem>>, vector<1x8x384xf32>
    %22 = vector.shape_cast %21 : vector<1x8x384xf32> to vector<8x384xf32>
    %23 = arith.truncf %22 : vector<8x384xf32> to vector<8x384xbf16>
    %c40 = arith.constant 40 : index
    %c0_20 = arith.constant 0 : index
    %24 = vector.load %arg8[%c40, %c0_20] : memref<72x768xbf16, #tpu.memory_space<vmem>>, vector<8x384xbf16>
    tpu.vector_store %arg8[%c40, %c0_20], %23 {strides = array<i32>} : memref<72x768xbf16, #tpu.memory_space<vmem>>, vector<8x384xbf16>,
    %c0_21 = arith.constant 0 : index
    %c0_22 = arith.constant 0 : index
    %c36 = arith.constant 36 : index
    %25 = vector.load %arg1[%c0_21, %c0_22, %c36] : memref<2x8x512xf32, #tpu.memory_space<vmem>>, vector<1x8x384xf32>
    %26 = vector.shape_cast %25 : vector<1x8x384xf32> to vector<8x384xf32>
    %27 = arith.truncf %26 : vector<8x384xf32> to vector<8x384xbf16>
    %c48 = arith.constant 48 : index
    %c0_23 = arith.constant 0 : index
    %28 = vector.load %arg8[%c48, %c0_23] : memref<72x768xbf16, #tpu.memory_space<vmem>>, vector<8x384xbf16>
    tpu.vector_store %arg8[%c48, %c0_23], %27 {strides = array<i32>} : memref<72x768xbf16, #tpu.memory_space<vmem>>, vector<8x384xbf16>,
    %c0_24 = arith.constant 0 : index
    %c0_25 = arith.constant 0 : index
    %c37 = arith.constant 37 : index
    %29 = vector.load %arg1[%c0_24, %c0_25, %c37] : memref<2x8x512xf32, #tpu.memory_space<vmem>>, vector<1x8x384xf32>
    %30 = vector.shape_cast %29 : vector<1x8x384xf32> to vector<8x384xf32>
    %31 = arith.truncf %30 : vector<8x384xf32> to vector<8x384xbf16>
    %c56 = arith.constant 56 : index
    %c0_26 = arith.constant 0 : index
    %32 = vector.load %arg8[%c56, %c0_26] : memref<72x768xbf16, #tpu.memory_space<vmem>>, vector<8x384xbf16>
    tpu.vector_store %arg8[%c56, %c0_26], %31 {strides = array<i32>} : memref<72x768xbf16, #tpu.memory_space<vmem>>, vector<8x384xbf16>,
    %c0_27 = arith.constant 0 : index
    %c0_28 = arith.constant 0 : index
    %c38 = arith.constant 38 : index
    %33 = vector.load %arg1[%c0_27, %c0_28, %c38] : memref<2x8x512xf32, #tpu.memory_space<vmem>>, vector<1x8x384xf32>
    %34 = vector.shape_cast %33 : vector<1x8x384xf32> to vector<8x384xf32>
    %35 = arith.truncf %34 : vector<8x384xf32> to vector<8x384xbf16>
    %c64 = arith.constant 64 : index
    %c0_29 = arith.constant 0 : index
    %36 = vector.load %arg8[%c64, %c0_29] : memref<72x768xbf16, #tpu.memory_space<vmem>>, vector<8x384xbf16>
    tpu.vector_store %arg8[%c64, %c0_29], %35 {strides = array<i32>} : memref<72x768xbf16, #tpu.memory_space<vmem>>, vector<8x384xbf16>,
    %c1_30 = arith.constant 1 : index
    %c0_31 = arith.constant 0 : index
    %c0_32 = arith.constant 0 : index
    %37 = vector.load %arg1[%c1_30, %c0_31, %c0_32] : memref<2x8x512xf32, #tpu.memory_space<vmem>>, vector<1x8x384xf32>
    %38 = vector.shape_cast %37 : vector<1x8x384xf32> to vector<8x384xf32>
    %39 = arith.truncf %38 : vector<8x384xf32> to vector<8x384xbf16>
    %c0_33 = arith.constant 0 : index
    %c384 = arith.constant 384 : index
    %40 = vector.load %arg8[%c0_33, %c384] : memref<72x768xbf16, #tpu.memory_space<vmem>>, vector<8x384xbf16>
    tpu.vector_store %arg8[%c0_33, %c384], %39 {strides = array<i32>} : memref<72x768xbf16, #tpu.memory_space<vmem>>, vector<8x384xbf16>,
    %c1_34 = arith.constant 1 : index
    %c0_35 = arith.constant 0 : index
    %c1_36 = arith.constant 1 : index
    %41 = vector.load %arg1[%c1_34, %c0_35, %c1_36] : memref<2x8x512xf32, #tpu.memory_space<vmem>>, vector<1x8x384xf32>
    %42 = vector.shape_cast %41 : vector<1x8x384xf32> to vector<8x384xf32>
    %43 = arith.truncf %42 : vector<8x384xf32> to vector<8x384xbf16>
    %c8_37 = arith.constant 8 : index
    %c384_38 = arith.constant 384 : index
    %44 = vector.load %arg8[%c8_37, %c384_38] : memref<72x768xbf16, #tpu.memory_space<vmem>>, vector<8x384xbf16>
    tpu.vector_store %arg8[%c8_37, %c384_38], %43 {strides = array<i32>} : memref<72x768xbf16, #tpu.memory_space<vmem>>, vector<8x384xbf16>,
    %c1_39 = arith.constant 1 : index
    %c0_40 = arith.constant 0 : index
    %c2_41 = arith.constant 2 : index
    %45 = vector.load %arg1[%c1_39, %c0_40, %c2_41] : memref<2x8x512xf32, #tpu.memory_space<vmem>>, vector<1x8x384xf32>
    %46 = vector.shape_cast %45 : vector<1x8x384xf32> to vector<8x384xf32>
    %47 = arith.truncf %46 : vector<8x384xf32> to vector<8x384xbf16>
    %c16_42 = arith.constant 16 : index
    %c384_43 = arith.constant 384 : index
    %48 = vector.load %arg8[%c16_42, %c384_43] : memref<72x768xbf16, #tpu.memory_space<vmem>>, vector<8x384xbf16>
    tpu.vector_store %arg8[%c16_42, %c384_43], %47 {strides = array<i32>} : memref<72x768xbf16, #tpu.memory_space<vmem>>, vector<8x384xbf16>,
    %c1_44 = arith.constant 1 : index
    %c0_45 = arith.constant 0 : index
    %c18_46 = arith.constant 18 : index
    %49 = vector.load %arg1[%c1_44, %c0_45, %c18_46] : memref<2x8x512xf32, #tpu.memory_space<vmem>>, vector<1x8x384xf32>
    %50 = vector.shape_cast %49 : vector<1x8x384xf32> to vector<8x384xf32>
    %51 = arith.truncf %50 : vector<8x384xf32> to vector<8x384xbf16>
    %c24_47 = arith.constant 24 : index
    %c384_48 = arith.constant 384 : index
    %52 = vector.load %arg8[%c24_47, %c384_48] : memref<72x768xbf16, #tpu.memory_space<vmem>>, vector<8x384xbf16>
    tpu.vector_store %arg8[%c24_47, %c384_48], %51 {strides = array<i32>} : memref<72x768xbf16, #tpu.memory_space<vmem>>, vector<8x384xbf16>,
    %c1_49 = arith.constant 1 : index
    %c0_50 = arith.constant 0 : index
    %c19_51 = arith.constant 19 : index
    %53 = vector.load %arg1[%c1_49, %c0_50, %c19_51] : memref<2x8x512xf32, #tpu.memory_space<vmem>>, vector<1x8x384xf32>
    %54 = vector.shape_cast %53 : vector<1x8x384xf32> to vector<8x384xf32>
    %55 = arith.truncf %54 : vector<8x384xf32> to vector<8x384xbf16>
    %c32_52 = arith.constant 32 : index
    %c384_53 = arith.constant 384 : index
    %56 = vector.load %arg8[%c32_52, %c384_53] : memref<72x768xbf16, #tpu.memory_space<vmem>>, vector<8x384xbf16>
    tpu.vector_store %arg8[%c32_52, %c384_53], %55 {strides = array<i32>} : memref<72x768xbf16, #tpu.memory_space<vmem>>, vector<8x384xbf16>,
    %c1_54 = arith.constant 1 : index
    %c0_55 = arith.constant 0 : index
    %c20_56 = arith.constant 20 : index
    %57 = vector.load %arg1[%c1_54, %c0_55, %c20_56] : memref<2x8x512xf32, #tpu.memory_space<vmem>>, vector<1x8x384xf32>
    %58 = vector.shape_cast %57 : vector<1x8x384xf32> to vector<8x384xf32>
    %59 = arith.truncf %58 : vector<8x384xf32> to vector<8x384xbf16>
    %c40_57 = arith.constant 40 : index
    %c384_58 = arith.constant 384 : index
    %60 = vector.load %arg8[%c40_57, %c384_58] : memref<72x768xbf16, #tpu.memory_space<vmem>>, vector<8x384xbf16>
    tpu.vector_store %arg8[%c40_57, %c384_58], %59 {strides = array<i32>} : memref<72x768xbf16, #tpu.memory_space<vmem>>, vector<8x384xbf16>,
    %c1_59 = arith.constant 1 : index
    %c0_60 = arith.constant 0 : index
    %c36_61 = arith.constant 36 : index
    %61 = vector.load %arg1[%c1_59, %c0_60, %c36_61] : memref<2x8x512xf32, #tpu.memory_space<vmem>>, vector<1x8x384xf32>
    %62 = vector.shape_cast %61 : vector<1x8x384xf32> to vector<8x384xf32>
    %63 = arith.truncf %62 : vector<8x384xf32> to vector<8x384xbf16>
    %c48_62 = arith.constant 48 : index
    %c384_63 = arith.constant 384 : index
    %64 = vector.load %arg8[%c48_62, %c384_63] : memref<72x768xbf16, #tpu.memory_space<vmem>>, vector<8x384xbf16>
    tpu.vector_store %arg8[%c48_62, %c384_63], %63 {strides = array<i32>} : memref<72x768xbf16, #tpu.memory_space<vmem>>, vector<8x384xbf16>,
    %c1_64 = arith.constant 1 : index
    %c0_65 = arith.constant 0 : index
    %c37_66 = arith.constant 37 : index
    %65 = vector.load %arg1[%c1_64, %c0_65, %c37_66] : memref<2x8x512xf32, #tpu.memory_space<vmem>>, vector<1x8x384xf32>
    %66 = vector.shape_cast %65 : vector<1x8x384xf32> to vector<8x384xf32>
    %67 = arith.truncf %66 : vector<8x384xf32> to vector<8x384xbf16>
    %c56_67 = arith.constant 56 : index
    %c384_68 = arith.constant 384 : index
    %68 = vector.load %arg8[%c56_67, %c384_68] : memref<72x768xbf16, #tpu.memory_space<vmem>>, vector<8x384xbf16>
    tpu.vector_store %arg8[%c56_67, %c384_68], %67 {strides = array<i32>} : memref<72x768xbf16, #tpu.memory_space<vmem>>, vector<8x384xbf16>,
    %c1_69 = arith.constant 1 : index
    %c0_70 = arith.constant 0 : index
    %c38_71 = arith.constant 38 : index
    %69 = vector.load %arg1[%c1_69, %c0_70, %c38_71] : memref<2x8x512xf32, #tpu.memory_space<vmem>>, vector<1x8x384xf32>
    %70 = vector.shape_cast %69 : vector<1x8x384xf32> to vector<8x384xf32>
    %71 = arith.truncf %70 : vector<8x384xf32> to vector<8x384xbf16>
    %c64_72 = arith.constant 64 : index
    %c384_73 = arith.constant 384 : index
    %72 = vector.load %arg8[%c64_72, %c384_73] : memref<72x768xbf16, #tpu.memory_space<vmem>>, vector<8x384xbf16>
    tpu.vector_store %arg8[%c64_72, %c384_73], %71 {strides = array<i32>} : memref<72x768xbf16, #tpu.memory_space<vmem>>, vector<8x384xbf16>,
    %c0_74 = arith.constant 0 : index
    %c0_75 = arith.constant 0 : index
    %73 = vector.load %arg2[%c0_74, %c0_75] : memref<8x72xbf16, #tpu.memory_space<vmem>>, vector<8x72xbf16>
    %c0_76 = arith.constant 0 : index
    %c0_77 = arith.constant 0 : index
    %74 = vector.load %arg8[%c0_76, %c0_77] : memref<72x768xbf16, #tpu.memory_space<vmem>>, vector<72x768xbf16>
    %cst = arith.constant dense<0.000000e+00> : vector<8x768xf32>
    %75 = tpu.matmul %73, %74, %cst {dimension_numbers = #tpu.dot_dimension_numbers<[1], [0], [0], [1], [0, 0, 1, 1], [], []>} : vector<8x72xbf16>, vector<72x768xbf16>, vector<8x768xf32> -> vector<8x768xf32>
    %c0_78 = arith.constant 0 : index
    %c0_79 = arith.constant 0 : index
    %76 = vector.load %arg3[%c0_78, %c0_79] : memref<8x2xf32, #tpu.memory_space<vmem>>, vector<8x1xf32>
    %c0_80 = arith.constant 0 : index
    %c1_81 = arith.constant 1 : index
    %77 = vector.load %arg3[%c0_80, %c1_81] : memref<8x2xf32, #tpu.memory_space<vmem>>, vector<8x1xf32>
    %cst_82 = arith.constant 0.000000e+00 : f32
    %78 = vector.broadcast %cst_82 : f32 to vector<8x19xf32>
    %cst_83 = arith.constant 0.000000e+00 : f32
    %79 = vector.broadcast %cst_83 : f32 to vector<8x109xf32>
    %80 = vector.extract_strided_slice %75 {offsets = [0, 0], sizes = [8, 384], strides = [1, 1]} : vector<8x768xf32> to vector<8x384xf32>
    %81 = vector.broadcast %0 : vector<1x384xf32> to vector<8x384xf32>
    %82 = arith.mulf %80, %81 : vector<8x384xf32>
    %cst_84 = arith.constant dense<0.000000e+00> : vector<8xf32>
    %83 = vector.multi_reduction <add>, %82, %cst_84 [1] : vector<8x384xf32> to vector<8xf32>
    %84 = vector.shape_cast %83 : vector<8xf32> to vector<8x1xf32>
    %85 = arith.mulf %82, %80 : vector<8x384xf32>
    %cst_85 = arith.constant dense<0.000000e+00> : vector<8xf32>
    %86 = vector.multi_reduction <add>, %85, %cst_85 [1] : vector<8x384xf32> to vector<8xf32>
    %87 = vector.shape_cast %86 : vector<8xf32> to vector<8x1xf32>
    %cst_86 = arith.constant 3.906250e-03 : f32
    %88 = vector.broadcast %cst_86 : f32 to vector<8x1xf32>
    %89 = arith.mulf %84, %88 : vector<8x1xf32>
    %cst_87 = arith.constant 3.906250e-03 : f32
    %90 = vector.broadcast %cst_87 : f32 to vector<8x1xf32>
    %91 = arith.mulf %87, %90 : vector<8x1xf32>
    %92 = arith.mulf %89, %89 : vector<8x1xf32>
    %93 = arith.subf %91, %92 : vector<8x1xf32>
    %cst_88 = arith.constant 9.99999974E-6 : f32
    %94 = vector.broadcast %cst_88 : f32 to vector<8x1xf32>
    %95 = arith.addf %93, %94 : vector<8x1xf32>
    %96 = math.rsqrt %95 : vector<8x1xf32>
    %97 = arith.mulf %76, %96 : vector<8x1xf32>
    %98 = arith.mulf %89, %97 : vector<8x1xf32>
    %99 = arith.subf %77, %98 : vector<8x1xf32>
    %100 = vector.broadcast %97 : vector<8x1xf32> to vector<8x384xf32>
    %101 = arith.mulf %80, %100 : vector<8x384xf32>
    %102 = vector.broadcast %99 : vector<8x1xf32> to vector<8x384xf32>
    %103 = arith.addf %101, %102 : vector<8x384xf32>
    %cst_89 = arith.constant 0.000000e+00 : f32
    %104 = vector.broadcast %cst_89 : f32 to vector<8x384xf32>
    %105 = arith.cmpf oge, %103, %104 : vector<8x384xf32>
    %cst_90 = arith.constant 0.00999999977 : f32
    %106 = vector.broadcast %cst_90 : f32 to vector<8x384xf32>
    %107 = arith.mulf %106, %103 : vector<8x384xf32>
    %108 = arith.select %105, %103, %107 : vector<8x384xi1>, vector<8x384xf32>
    %c0_91 = arith.constant 0 : index
    %c0_92 = arith.constant 0 : index
    %c0_93 = arith.constant 0 : index
    %109 = vector.load %arg10[%c0_91, %c0_92, %c0_93] : memref<2x8x512xf32, #tpu.memory_space<vmem>>, vector<1x8x19xf32>
    %110 = vector.shape_cast %109 : vector<1x8x19xf32> to vector<8x19xf32>
    %111 = vector.shape_cast %78 : vector<8x19xf32> to vector<1x8x19xf32>
    tpu.vector_store %arg10[%c0_91, %c0_92, %c0_93], %111 {strides = array<i32>} : memref<2x8x512xf32, #tpu.memory_space<vmem>>, vector<1x8x19xf32>,
    %c0_94 = arith.constant 0 : index
    %c0_95 = arith.constant 0 : index
    %c403 = arith.constant 403 : index
    %112 = vector.load %arg10[%c0_94, %c0_95, %c403] : memref<2x8x512xf32, #tpu.memory_space<vmem>>, vector<1x8x109xf32>
    %113 = vector.shape_cast %112 : vector<1x8x109xf32> to vector<8x109xf32>
    %114 = vector.shape_cast %79 : vector<8x109xf32> to vector<1x8x109xf32>
    tpu.vector_store %arg10[%c0_94, %c0_95, %c403], %114 {strides = array<i32>} : memref<2x8x512xf32, #tpu.memory_space<vmem>>, vector<1x8x109xf32>,
    %115 = vector.broadcast %0 : vector<1x384xf32> to vector<8x384xf32>
    %116 = arith.mulf %108, %115 : vector<8x384xf32>
    %c0_96 = arith.constant 0 : index
    %c0_97 = arith.constant 0 : index
    %c19_98 = arith.constant 19 : index
    %117 = vector.load %arg10[%c0_96, %c0_97, %c19_98] : memref<2x8x512xf32, #tpu.memory_space<vmem>>, vector<1x8x384xf32>
    %118 = vector.shape_cast %117 : vector<1x8x384xf32> to vector<8x384xf32>
    %119 = vector.shape_cast %116 : vector<8x384xf32> to vector<1x8x384xf32>
    tpu.vector_store %arg10[%c0_96, %c0_97, %c19_98], %119 {strides = array<i32>} : memref<2x8x512xf32, #tpu.memory_space<vmem>>, vector<1x8x384xf32>,
    %120 = vector.extract_strided_slice %75 {offsets = [0, 384], sizes = [8, 384], strides = [1, 1]} : vector<8x768xf32> to vector<8x384xf32>
    %121 = vector.broadcast %0 : vector<1x384xf32> to vector<8x384xf32>
    %122 = arith.mulf %120, %121 : vector<8x384xf32>
    %cst_99 = arith.constant dense<0.000000e+00> : vector<8xf32>
    %123 = vector.multi_reduction <add>, %122, %cst_99 [1] : vector<8x384xf32> to vector<8xf32>
    %124 = vector.shape_cast %123 : vector<8xf32> to vector<8x1xf32>
    %125 = arith.mulf %122, %120 : vector<8x384xf32>
    %cst_100 = arith.constant dense<0.000000e+00> : vector<8xf32>
    %126 = vector.multi_reduction <add>, %125, %cst_100 [1] : vector<8x384xf32> to vector<8xf32>
    %127 = vector.shape_cast %126 : vector<8xf32> to vector<8x1xf32>
    %cst_101 = arith.constant 3.906250e-03 : f32
    %128 = vector.broadcast %cst_101 : f32 to vector<8x1xf32>
    %129 = arith.mulf %124, %128 : vector<8x1xf32>
    %cst_102 = arith.constant 3.906250e-03 : f32
    %130 = vector.broadcast %cst_102 : f32 to vector<8x1xf32>
    %131 = arith.mulf %127, %130 : vector<8x1xf32>
    %132 = arith.mulf %129, %129 : vector<8x1xf32>
    %133 = arith.subf %131, %132 : vector<8x1xf32>
    %cst_103 = arith.constant 9.99999974E-6 : f32
    %134 = vector.broadcast %cst_103 : f32 to vector<8x1xf32>
    %135 = arith.addf %133, %134 : vector<8x1xf32>
    %136 = math.rsqrt %135 : vector<8x1xf32>
    %137 = arith.mulf %76, %136 : vector<8x1xf32>
    %138 = arith.mulf %129, %137 : vector<8x1xf32>
    %139 = arith.subf %77, %138 : vector<8x1xf32>
    %140 = vector.broadcast %137 : vector<8x1xf32> to vector<8x384xf32>
    %141 = arith.mulf %120, %140 : vector<8x384xf32>
    %142 = vector.broadcast %139 : vector<8x1xf32> to vector<8x384xf32>
    %143 = arith.addf %141, %142 : vector<8x384xf32>
    %cst_104 = arith.constant 0.000000e+00 : f32
    %144 = vector.broadcast %cst_104 : f32 to vector<8x384xf32>
    %145 = arith.cmpf oge, %143, %144 : vector<8x384xf32>
    %cst_105 = arith.constant 0.00999999977 : f32
    %146 = vector.broadcast %cst_105 : f32 to vector<8x384xf32>
    %147 = arith.mulf %146, %143 : vector<8x384xf32>
    %148 = arith.select %145, %143, %147 : vector<8x384xi1>, vector<8x384xf32>
    %c1_106 = arith.constant 1 : index
    %c0_107 = arith.constant 0 : index
    %c0_108 = arith.constant 0 : index
    %149 = vector.load %arg10[%c1_106, %c0_107, %c0_108] : memref<2x8x512xf32, #tpu.memory_space<vmem>>, vector<1x8x19xf32>
    %150 = vector.shape_cast %149 : vector<1x8x19xf32> to vector<8x19xf32>
    %151 = vector.shape_cast %78 : vector<8x19xf32> to vector<1x8x19xf32>
    tpu.vector_store %arg10[%c1_106, %c0_107, %c0_108], %151 {strides = array<i32>} : memref<2x8x512xf32, #tpu.memory_space<vmem>>, vector<1x8x19xf32>,
    %c1_109 = arith.constant 1 : index
    %c0_110 = arith.constant 0 : index
    %c403_111 = arith.constant 403 : index
    %152 = vector.load %arg10[%c1_109, %c0_110, %c403_111] : memref<2x8x512xf32, #tpu.memory_space<vmem>>, vector<1x8x109xf32>
    %153 = vector.shape_cast %152 : vector<1x8x109xf32> to vector<8x109xf32>
    %154 = vector.shape_cast %79 : vector<8x109xf32> to vector<1x8x109xf32>
    tpu.vector_store %arg10[%c1_109, %c0_110, %c403_111], %154 {strides = array<i32>} : memref<2x8x512xf32, #tpu.memory_space<vmem>>, vector<1x8x109xf32>,
    %155 = vector.broadcast %0 : vector<1x384xf32> to vector<8x384xf32>
    %156 = arith.mulf %148, %155 : vector<8x384xf32>
    %c1_112 = arith.constant 1 : index
    %c0_113 = arith.constant 0 : index
    %c19_114 = arith.constant 19 : index
    %157 = vector.load %arg10[%c1_112, %c0_113, %c19_114] : memref<2x8x512xf32, #tpu.memory_space<vmem>>, vector<1x8x384xf32>
    %158 = vector.shape_cast %157 : vector<1x8x384xf32> to vector<8x384xf32>
    %159 = vector.shape_cast %156 : vector<8x384xf32> to vector<1x8x384xf32>
    tpu.vector_store %arg10[%c1_112, %c0_113, %c19_114], %159 {strides = array<i32>} : memref<2x8x512xf32, #tpu.memory_space<vmem>>, vector<1x8x384xf32>,
    %c0_115 = arith.constant 0 : index
    %c0_116 = arith.constant 0 : index
    %c0_117 = arith.constant 0 : index
    %160 = vector.load %arg10[%c0_115, %c0_116, %c0_117] : memref<2x8x512xf32, #tpu.memory_space<vmem>>, vector<1x8x384xf32>
    %161 = vector.shape_cast %160 : vector<1x8x384xf32> to vector<8x384xf32>
    %162 = arith.truncf %161 : vector<8x384xf32> to vector<8x384xbf16>
    %c0_118 = arith.constant 0 : index
    %c0_119 = arith.constant 0 : index
    %163 = vector.load %arg9[%c0_118, %c0_119] : memref<72x768xbf16, #tpu.memory_space<vmem>>, vector<8x384xbf16>
    tpu.vector_store %arg9[%c0_118, %c0_119], %162 {strides = array<i32>} : memref<72x768xbf16, #tpu.memory_space<vmem>>, vector<8x384xbf16>,
    %c0_120 = arith.constant 0 : index
    %c0_121 = arith.constant 0 : index
    %c1_122 = arith.constant 1 : index
    %164 = vector.load %arg10[%c0_120, %c0_121, %c1_122] : memref<2x8x512xf32, #tpu.memory_space<vmem>>, vector<1x8x384xf32>
    %165 = vector.shape_cast %164 : vector<1x8x384xf32> to vector<8x384xf32>
    %166 = arith.truncf %165 : vector<8x384xf32> to vector<8x384xbf16>
    %c8_123 = arith.constant 8 : index
    %c0_124 = arith.constant 0 : index
    %167 = vector.load %arg9[%c8_123, %c0_124] : memref<72x768xbf16, #tpu.memory_space<vmem>>, vector<8x384xbf16>
    tpu.vector_store %arg9[%c8_123, %c0_124], %166 {strides = array<i32>} : memref<72x768xbf16, #tpu.memory_space<vmem>>, vector<8x384xbf16>,
    %c0_125 = arith.constant 0 : index
    %c0_126 = arith.constant 0 : index
    %c2_127 = arith.constant 2 : index
    %168 = vector.load %arg10[%c0_125, %c0_126, %c2_127] : memref<2x8x512xf32, #tpu.memory_space<vmem>>, vector<1x8x384xf32>
    %169 = vector.shape_cast %168 : vector<1x8x384xf32> to vector<8x384xf32>
    %170 = arith.truncf %169 : vector<8x384xf32> to vector<8x384xbf16>
    %c16_128 = arith.constant 16 : index
    %c0_129 = arith.constant 0 : index
    %171 = vector.load %arg9[%c16_128, %c0_129] : memref<72x768xbf16, #tpu.memory_space<vmem>>, vector<8x384xbf16>
    tpu.vector_store %arg9[%c16_128, %c0_129], %170 {strides = array<i32>} : memref<72x768xbf16, #tpu.memory_space<vmem>>, vector<8x384xbf16>,
    %c0_130 = arith.constant 0 : index
    %c0_131 = arith.constant 0 : index
    %c18_132 = arith.constant 18 : index
    %172 = vector.load %arg10[%c0_130, %c0_131, %c18_132] : memref<2x8x512xf32, #tpu.memory_space<vmem>>, vector<1x8x384xf32>
    %173 = vector.shape_cast %172 : vector<1x8x384xf32> to vector<8x384xf32>
    %174 = arith.truncf %173 : vector<8x384xf32> to vector<8x384xbf16>
    %c24_133 = arith.constant 24 : index
    %c0_134 = arith.constant 0 : index
    %175 = vector.load %arg9[%c24_133, %c0_134] : memref<72x768xbf16, #tpu.memory_space<vmem>>, vector<8x384xbf16>
    tpu.vector_store %arg9[%c24_133, %c0_134], %174 {strides = array<i32>} : memref<72x768xbf16, #tpu.memory_space<vmem>>, vector<8x384xbf16>,
    %c0_135 = arith.constant 0 : index
    %c0_136 = arith.constant 0 : index
    %c19_137 = arith.constant 19 : index
    %176 = vector.load %arg10[%c0_135, %c0_136, %c19_137] : memref<2x8x512xf32, #tpu.memory_space<vmem>>, vector<1x8x384xf32>
    %177 = vector.shape_cast %176 : vector<1x8x384xf32> to vector<8x384xf32>
    %178 = arith.truncf %177 : vector<8x384xf32> to vector<8x384xbf16>
    %c32_138 = arith.constant 32 : index
    %c0_139 = arith.constant 0 : index
    %179 = vector.load %arg9[%c32_138, %c0_139] : memref<72x768xbf16, #tpu.memory_space<vmem>>, vector<8x384xbf16>
    tpu.vector_store %arg9[%c32_138, %c0_139], %178 {strides = array<i32>} : memref<72x768xbf16, #tpu.memory_space<vmem>>, vector<8x384xbf16>,
    %c0_140 = arith.constant 0 : index
    %c0_141 = arith.constant 0 : index
    %c20_142 = arith.constant 20 : index
    %180 = vector.load %arg10[%c0_140, %c0_141, %c20_142] : memref<2x8x512xf32, #tpu.memory_space<vmem>>, vector<1x8x384xf32>
    %181 = vector.shape_cast %180 : vector<1x8x384xf32> to vector<8x384xf32>
    %182 = arith.truncf %181 : vector<8x384xf32> to vector<8x384xbf16>
    %c40_143 = arith.constant 40 : index
    %c0_144 = arith.constant 0 : index
    %183 = vector.load %arg9[%c40_143, %c0_144] : memref<72x768xbf16, #tpu.memory_space<vmem>>, vector<8x384xbf16>
    tpu.vector_store %arg9[%c40_143, %c0_144], %182 {strides = array<i32>} : memref<72x768xbf16, #tpu.memory_space<vmem>>, vector<8x384xbf16>,
    %c0_145 = arith.constant 0 : index
    %c0_146 = arith.constant 0 : index
    %c36_147 = arith.constant 36 : index
    %184 = vector.load %arg10[%c0_145, %c0_146, %c36_147] : memref<2x8x512xf32, #tpu.memory_space<vmem>>, vector<1x8x384xf32>
    %185 = vector.shape_cast %184 : vector<1x8x384xf32> to vector<8x384xf32>
    %186 = arith.truncf %185 : vector<8x384xf32> to vector<8x384xbf16>
    %c48_148 = arith.constant 48 : index
    %c0_149 = arith.constant 0 : index
    %187 = vector.load %arg9[%c48_148, %c0_149] : memref<72x768xbf16, #tpu.memory_space<vmem>>, vector<8x384xbf16>
    tpu.vector_store %arg9[%c48_148, %c0_149], %186 {strides = array<i32>} : memref<72x768xbf16, #tpu.memory_space<vmem>>, vector<8x384xbf16>,
    %c0_150 = arith.constant 0 : index
    %c0_151 = arith.constant 0 : index
    %c37_152 = arith.constant 37 : index
    %188 = vector.load %arg10[%c0_150, %c0_151, %c37_152] : memref<2x8x512xf32, #tpu.memory_space<vmem>>, vector<1x8x384xf32>
    %189 = vector.shape_cast %188 : vector<1x8x384xf32> to vector<8x384xf32>
    %190 = arith.truncf %189 : vector<8x384xf32> to vector<8x384xbf16>
    %c56_153 = arith.constant 56 : index
    %c0_154 = arith.constant 0 : index
    %191 = vector.load %arg9[%c56_153, %c0_154] : memref<72x768xbf16, #tpu.memory_space<vmem>>, vector<8x384xbf16>
    tpu.vector_store %arg9[%c56_153, %c0_154], %190 {strides = array<i32>} : memref<72x768xbf16, #tpu.memory_space<vmem>>, vector<8x384xbf16>,
    %c0_155 = arith.constant 0 : index
    %c0_156 = arith.constant 0 : index
    %c38_157 = arith.constant 38 : index
    %192 = vector.load %arg10[%c0_155, %c0_156, %c38_157] : memref<2x8x512xf32, #tpu.memory_space<vmem>>, vector<1x8x384xf32>
    %193 = vector.shape_cast %192 : vector<1x8x384xf32> to vector<8x384xf32>
    %194 = arith.truncf %193 : vector<8x384xf32> to vector<8x384xbf16>
    %c64_158 = arith.constant 64 : index
    %c0_159 = arith.constant 0 : index
    %195 = vector.load %arg9[%c64_158, %c0_159] : memref<72x768xbf16, #tpu.memory_space<vmem>>, vector<8x384xbf16>
    tpu.vector_store %arg9[%c64_158, %c0_159], %194 {strides = array<i32>} : memref<72x768xbf16, #tpu.memory_space<vmem>>, vector<8x384xbf16>,
    %c1_160 = arith.constant 1 : index
    %c0_161 = arith.constant 0 : index
    %c0_162 = arith.constant 0 : index
    %196 = vector.load %arg10[%c1_160, %c0_161, %c0_162] : memref<2x8x512xf32, #tpu.memory_space<vmem>>, vector<1x8x384xf32>
    %197 = vector.shape_cast %196 : vector<1x8x384xf32> to vector<8x384xf32>
    %198 = arith.truncf %197 : vector<8x384xf32> to vector<8x384xbf16>
    %c0_163 = arith.constant 0 : index
    %c384_164 = arith.constant 384 : index
    %199 = vector.load %arg9[%c0_163, %c384_164] : memref<72x768xbf16, #tpu.memory_space<vmem>>, vector<8x384xbf16>
    tpu.vector_store %arg9[%c0_163, %c384_164], %198 {strides = array<i32>} : memref<72x768xbf16, #tpu.memory_space<vmem>>, vector<8x384xbf16>,
    %c1_165 = arith.constant 1 : index
    %c0_166 = arith.constant 0 : index
    %c1_167 = arith.constant 1 : index
    %200 = vector.load %arg10[%c1_165, %c0_166, %c1_167] : memref<2x8x512xf32, #tpu.memory_space<vmem>>, vector<1x8x384xf32>
    %201 = vector.shape_cast %200 : vector<1x8x384xf32> to vector<8x384xf32>
    %202 = arith.truncf %201 : vector<8x384xf32> to vector<8x384xbf16>
    %c8_168 = arith.constant 8 : index
    %c384_169 = arith.constant 384 : index
    %203 = vector.load %arg9[%c8_168, %c384_169] : memref<72x768xbf16, #tpu.memory_space<vmem>>, vector<8x384xbf16>
    tpu.vector_store %arg9[%c8_168, %c384_169], %202 {strides = array<i32>} : memref<72x768xbf16, #tpu.memory_space<vmem>>, vector<8x384xbf16>,
    %c1_170 = arith.constant 1 : index
    %c0_171 = arith.constant 0 : index
    %c2_172 = arith.constant 2 : index
    %204 = vector.load %arg10[%c1_170, %c0_171, %c2_172] : memref<2x8x512xf32, #tpu.memory_space<vmem>>, vector<1x8x384xf32>
    %205 = vector.shape_cast %204 : vector<1x8x384xf32> to vector<8x384xf32>
    %206 = arith.truncf %205 : vector<8x384xf32> to vector<8x384xbf16>
    %c16_173 = arith.constant 16 : index
    %c384_174 = arith.constant 384 : index
    %207 = vector.load %arg9[%c16_173, %c384_174] : memref<72x768xbf16, #tpu.memory_space<vmem>>, vector<8x384xbf16>
    tpu.vector_store %arg9[%c16_173, %c384_174], %206 {strides = array<i32>} : memref<72x768xbf16, #tpu.memory_space<vmem>>, vector<8x384xbf16>,
    %c1_175 = arith.constant 1 : index
    %c0_176 = arith.constant 0 : index
    %c18_177 = arith.constant 18 : index
    %208 = vector.load %arg10[%c1_175, %c0_176, %c18_177] : memref<2x8x512xf32, #tpu.memory_space<vmem>>, vector<1x8x384xf32>
    %209 = vector.shape_cast %208 : vector<1x8x384xf32> to vector<8x384xf32>
    %210 = arith.truncf %209 : vector<8x384xf32> to vector<8x384xbf16>
    %c24_178 = arith.constant 24 : index
    %c384_179 = arith.constant 384 : index
    %211 = vector.load %arg9[%c24_178, %c384_179] : memref<72x768xbf16, #tpu.memory_space<vmem>>, vector<8x384xbf16>
    tpu.vector_store %arg9[%c24_178, %c384_179], %210 {strides = array<i32>} : memref<72x768xbf16, #tpu.memory_space<vmem>>, vector<8x384xbf16>,
    %c1_180 = arith.constant 1 : index
    %c0_181 = arith.constant 0 : index
    %c19_182 = arith.constant 19 : index
    %212 = vector.load %arg10[%c1_180, %c0_181, %c19_182] : memref<2x8x512xf32, #tpu.memory_space<vmem>>, vector<1x8x384xf32>
    %213 = vector.shape_cast %212 : vector<1x8x384xf32> to vector<8x384xf32>
    %214 = arith.truncf %213 : vector<8x384xf32> to vector<8x384xbf16>
    %c32_183 = arith.constant 32 : index
    %c384_184 = arith.constant 384 : index
    %215 = vector.load %arg9[%c32_183, %c384_184] : memref<72x768xbf16, #tpu.memory_space<vmem>>, vector<8x384xbf16>
    tpu.vector_store %arg9[%c32_183, %c384_184], %214 {strides = array<i32>} : memref<72x768xbf16, #tpu.memory_space<vmem>>, vector<8x384xbf16>,
    %c1_185 = arith.constant 1 : index
    %c0_186 = arith.constant 0 : index
    %c20_187 = arith.constant 20 : index
    %216 = vector.load %arg10[%c1_185, %c0_186, %c20_187] : memref<2x8x512xf32, #tpu.memory_space<vmem>>, vector<1x8x384xf32>
    %217 = vector.shape_cast %216 : vector<1x8x384xf32> to vector<8x384xf32>
    %218 = arith.truncf %217 : vector<8x384xf32> to vector<8x384xbf16>
    %c40_188 = arith.constant 40 : index
    %c384_189 = arith.constant 384 : index
    %219 = vector.load %arg9[%c40_188, %c384_189] : memref<72x768xbf16, #tpu.memory_space<vmem>>, vector<8x384xbf16>
    tpu.vector_store %arg9[%c40_188, %c384_189], %218 {strides = array<i32>} : memref<72x768xbf16, #tpu.memory_space<vmem>>, vector<8x384xbf16>,
    %c1_190 = arith.constant 1 : index
    %c0_191 = arith.constant 0 : index
    %c36_192 = arith.constant 36 : index
    %220 = vector.load %arg10[%c1_190, %c0_191, %c36_192] : memref<2x8x512xf32, #tpu.memory_space<vmem>>, vector<1x8x384xf32>
    %221 = vector.shape_cast %220 : vector<1x8x384xf32> to vector<8x384xf32>
    %222 = arith.truncf %221 : vector<8x384xf32> to vector<8x384xbf16>
    %c48_193 = arith.constant 48 : index
    %c384_194 = arith.constant 384 : index
    %223 = vector.load %arg9[%c48_193, %c384_194] : memref<72x768xbf16, #tpu.memory_space<vmem>>, vector<8x384xbf16>
    tpu.vector_store %arg9[%c48_193, %c384_194], %222 {strides = array<i32>} : memref<72x768xbf16, #tpu.memory_space<vmem>>, vector<8x384xbf16>,
    %c1_195 = arith.constant 1 : index
    %c0_196 = arith.constant 0 : index
    %c37_197 = arith.constant 37 : index
    %224 = vector.load %arg10[%c1_195, %c0_196, %c37_197] : memref<2x8x512xf32, #tpu.memory_space<vmem>>, vector<1x8x384xf32>
    %225 = vector.shape_cast %224 : vector<1x8x384xf32> to vector<8x384xf32>
    %226 = arith.truncf %225 : vector<8x384xf32> to vector<8x384xbf16>
    %c56_198 = arith.constant 56 : index
    %c384_199 = arith.constant 384 : index
    %227 = vector.load %arg9[%c56_198, %c384_199] : memref<72x768xbf16, #tpu.memory_space<vmem>>, vector<8x384xbf16>
    tpu.vector_store %arg9[%c56_198, %c384_199], %226 {strides = array<i32>} : memref<72x768xbf16, #tpu.memory_space<vmem>>, vector<8x384xbf16>,
    %c1_200 = arith.constant 1 : index
    %c0_201 = arith.constant 0 : index
    %c38_202 = arith.constant 38 : index
    %228 = vector.load %arg10[%c1_200, %c0_201, %c38_202] : memref<2x8x512xf32, #tpu.memory_space<vmem>>, vector<1x8x384xf32>
    %229 = vector.shape_cast %228 : vector<1x8x384xf32> to vector<8x384xf32>
    %230 = arith.truncf %229 : vector<8x384xf32> to vector<8x384xbf16>
    %c64_203 = arith.constant 64 : index
    %c384_204 = arith.constant 384 : index
    %231 = vector.load %arg9[%c64_203, %c384_204] : memref<72x768xbf16, #tpu.memory_space<vmem>>, vector<8x384xbf16>
    tpu.vector_store %arg9[%c64_203, %c384_204], %230 {strides = array<i32>} : memref<72x768xbf16, #tpu.memory_space<vmem>>, vector<8x384xbf16>,
    %c0_205 = arith.constant 0 : index
    %c0_206 = arith.constant 0 : index
    %232 = vector.load %arg4[%c0_205, %c0_206] : memref<8x72xbf16, #tpu.memory_space<vmem>>, vector<8x72xbf16>
    %c0_207 = arith.constant 0 : index
    %c0_208 = arith.constant 0 : index
    %233 = vector.load %arg9[%c0_207, %c0_208] : memref<72x768xbf16, #tpu.memory_space<vmem>>, vector<72x768xbf16>
    %cst_209 = arith.constant dense<0.000000e+00> : vector<8x768xf32>
    %234 = tpu.matmul %232, %233, %cst_209 {dimension_numbers = #tpu.dot_dimension_numbers<[1], [0], [0], [1], [0, 0, 1, 1], [], []>} : vector<8x72xbf16>, vector<72x768xbf16>, vector<8x768xf32> -> vector<8x768xf32>
    %c0_210 = arith.constant 0 : index
    %c0_211 = arith.constant 0 : index
    %235 = vector.load %arg5[%c0_210, %c0_211] : memref<8x2xf32, #tpu.memory_space<vmem>>, vector<8x1xf32>
    %c0_212 = arith.constant 0 : index
    %c1_213 = arith.constant 1 : index
    %236 = vector.load %arg5[%c0_212, %c1_213] : memref<8x2xf32, #tpu.memory_space<vmem>>, vector<8x1xf32>
    %237 = vector.extract_strided_slice %234 {offsets = [0, 0], sizes = [8, 384], strides = [1, 1]} : vector<8x768xf32> to vector<8x384xf32>
    %238 = vector.broadcast %0 : vector<1x384xf32> to vector<8x384xf32>
    %239 = arith.mulf %237, %238 : vector<8x384xf32>
    %cst_214 = arith.constant dense<0.000000e+00> : vector<8xf32>
    %240 = vector.multi_reduction <add>, %239, %cst_214 [1] : vector<8x384xf32> to vector<8xf32>
    %241 = vector.shape_cast %240 : vector<8xf32> to vector<8x1xf32>
    %242 = arith.mulf %239, %237 : vector<8x384xf32>
    %cst_215 = arith.constant dense<0.000000e+00> : vector<8xf32>
    %243 = vector.multi_reduction <add>, %242, %cst_215 [1] : vector<8x384xf32> to vector<8xf32>
    %244 = vector.shape_cast %243 : vector<8xf32> to vector<8x1xf32>
    %cst_216 = arith.constant 3.906250e-03 : f32
    %245 = vector.broadcast %cst_216 : f32 to vector<8x1xf32>
    %246 = arith.mulf %241, %245 : vector<8x1xf32>
    %cst_217 = arith.constant 3.906250e-03 : f32
    %247 = vector.broadcast %cst_217 : f32 to vector<8x1xf32>
    %248 = arith.mulf %244, %247 : vector<8x1xf32>
    %249 = arith.mulf %246, %246 : vector<8x1xf32>
    %250 = arith.subf %248, %249 : vector<8x1xf32>
    %cst_218 = arith.constant 9.99999974E-6 : f32
    %251 = vector.broadcast %cst_218 : f32 to vector<8x1xf32>
    %252 = arith.addf %250, %251 : vector<8x1xf32>
    %253 = math.rsqrt %252 : vector<8x1xf32>
    %254 = arith.mulf %235, %253 : vector<8x1xf32>
    %255 = arith.mulf %246, %254 : vector<8x1xf32>
    %256 = arith.subf %236, %255 : vector<8x1xf32>
    %257 = vector.broadcast %254 : vector<8x1xf32> to vector<8x384xf32>
    %258 = arith.mulf %237, %257 : vector<8x384xf32>
    %259 = vector.broadcast %256 : vector<8x1xf32> to vector<8x384xf32>
    %260 = arith.addf %258, %259 : vector<8x384xf32>
    %cst_219 = arith.constant 0.000000e+00 : f32
    %261 = vector.broadcast %cst_219 : f32 to vector<8x384xf32>
    %262 = arith.cmpf oge, %260, %261 : vector<8x384xf32>
    %cst_220 = arith.constant 0.00999999977 : f32
    %263 = vector.broadcast %cst_220 : f32 to vector<8x384xf32>
    %264 = arith.mulf %263, %260 : vector<8x384xf32>
    %265 = arith.select %262, %260, %264 : vector<8x384xi1>, vector<8x384xf32>
    %c0_221 = arith.constant 0 : index
    %c0_222 = arith.constant 0 : index
    %c0_223 = arith.constant 0 : index
    %266 = vector.load %arg7[%c0_221, %c0_222, %c0_223] : memref<2x8x384xf32, #tpu.memory_space<vmem>>, vector<1x8x384xf32>
    %267 = vector.shape_cast %266 : vector<1x8x384xf32> to vector<8x384xf32>
    %268 = vector.shape_cast %265 : vector<8x384xf32> to vector<1x8x384xf32>
    tpu.vector_store %arg7[%c0_221, %c0_222, %c0_223], %268 {strides = array<i32>} : memref<2x8x384xf32, #tpu.memory_space<vmem>>, vector<1x8x384xf32>,
    %269 = vector.extract_strided_slice %234 {offsets = [0, 384], sizes = [8, 384], strides = [1, 1]} : vector<8x768xf32> to vector<8x384xf32>
    %270 = vector.broadcast %0 : vector<1x384xf32> to vector<8x384xf32>
    %271 = arith.mulf %269, %270 : vector<8x384xf32>
    %cst_224 = arith.constant dense<0.000000e+00> : vector<8xf32>
    %272 = vector.multi_reduction <add>, %271, %cst_224 [1] : vector<8x384xf32> to vector<8xf32>
    %273 = vector.shape_cast %272 : vector<8xf32> to vector<8x1xf32>
    %274 = arith.mulf %271, %269 : vector<8x384xf32>
    %cst_225 = arith.constant dense<0.000000e+00> : vector<8xf32>
    %275 = vector.multi_reduction <add>, %274, %cst_225 [1] : vector<8x384xf32> to vector<8xf32>
    %276 = vector.shape_cast %275 : vector<8xf32> to vector<8x1xf32>
    %cst_226 = arith.constant 3.906250e-03 : f32
    %277 = vector.broadcast %cst_226 : f32 to vector<8x1xf32>
    %278 = arith.mulf %273, %277 : vector<8x1xf32>
    %cst_227 = arith.constant 3.906250e-03 : f32
    %279 = vector.broadcast %cst_227 : f32 to vector<8x1xf32>
    %280 = arith.mulf %276, %279 : vector<8x1xf32>
    %281 = arith.mulf %278, %278 : vector<8x1xf32>
    %282 = arith.subf %280, %281 : vector<8x1xf32>
    %cst_228 = arith.constant 9.99999974E-6 : f32
    %283 = vector.broadcast %cst_228 : f32 to vector<8x1xf32>
    %284 = arith.addf %282, %283 : vector<8x1xf32>
    %285 = math.rsqrt %284 : vector<8x1xf32>
    %286 = arith.mulf %235, %285 : vector<8x1xf32>
    %287 = arith.mulf %278, %286 : vector<8x1xf32>
    %288 = arith.subf %236, %287 : vector<8x1xf32>
    %289 = vector.broadcast %286 : vector<8x1xf32> to vector<8x384xf32>
    %290 = arith.mulf %269, %289 : vector<8x384xf32>
    %291 = vector.broadcast %288 : vector<8x1xf32> to vector<8x384xf32>
    %292 = arith.addf %290, %291 : vector<8x384xf32>
    %cst_229 = arith.constant 0.000000e+00 : f32
    %293 = vector.broadcast %cst_229 : f32 to vector<8x384xf32>
    %294 = arith.cmpf oge, %292, %293 : vector<8x384xf32>
    %cst_230 = arith.constant 0.00999999977 : f32
    %295 = vector.broadcast %cst_230 : f32 to vector<8x384xf32>
    %296 = arith.mulf %295, %292 : vector<8x384xf32>
    %297 = arith.select %294, %292, %296 : vector<8x384xi1>, vector<8x384xf32>
    %c1_231 = arith.constant 1 : index
    %c0_232 = arith.constant 0 : index
    %c0_233 = arith.constant 0 : index
    %298 = vector.load %arg7[%c1_231, %c0_232, %c0_233] : memref<2x8x384xf32, #tpu.memory_space<vmem>>, vector<1x8x384xf32>
    %299 = vector.shape_cast %298 : vector<1x8x384xf32> to vector<8x384xf32>
    %300 = vector.shape_cast %297 : vector<8x384xf32> to vector<1x8x384xf32>
    tpu.vector_store %arg7[%c1_231, %c0_232, %c0_233], %300 {strides = array<i32>} : memref<2x8x384xf32, #tpu.memory_space<vmem>>, vector<1x8x384xf32>,
    return
  }
  func.func @transform_0(%arg0: i32) -> (i32, i32, i32) {
    %c0_i32 = arith.constant 0 : i32
    %c0_i32_0 = arith.constant 0 : i32
    %c0_i32_1 = arith.constant 0 : i32
    return %arg0, %c0_i32, %c0_i32_0 : i32, i32, i32
  }
  func.func @transform_1(%arg0: i32) -> (i32, i32) {
    %c0_i32 = arith.constant 0 : i32
    %c0_i32_0 = arith.constant 0 : i32
    %c0_i32_1 = arith.constant 0 : i32
    return %c0_i32, %c0_i32_0 : i32, i32
  }
  func.func @transform_2(%arg0: i32) -> (i32, i32) {
    %c0_i32 = arith.constant 0 : i32
    %c0_i32_0 = arith.constant 0 : i32
    %c0_i32_1 = arith.constant 0 : i32
    return %c0_i32, %c0_i32_0 : i32, i32
  }
  func.func @transform_3(%arg0: i32) -> (i32, i32) {
    %c0_i32 = arith.constant 0 : i32
    %c0_i32_0 = arith.constant 0 : i32
    %c0_i32_1 = arith.constant 0 : i32
    return %c0_i32, %c0_i32_0 : i32, i32
  }
  func.func @transform_4(%arg0: i32) -> (i32, i32) {
    %c0_i32 = arith.constant 0 : i32
    %c0_i32_0 = arith.constant 0 : i32
    %c0_i32_1 = arith.constant 0 : i32
    return %c0_i32, %c0_i32_0 : i32, i32
  }
  func.func @transform_5(%arg0: i32) -> (i32, i32) {
    %c0_i32 = arith.constant 0 : i32
    %c0_i32_0 = arith.constant 0 : i32
    %c0_i32_1 = arith.constant 0 : i32
    return %c0_i32, %c0_i32_0 : i32, i32
  }
  func.func @transform_6(%arg0: i32) -> (i32, i32, i32) {
    %c0_i32 = arith.constant 0 : i32
    %c0_i32_0 = arith.constant 0 : i32
    %c0_i32_1 = arith.constant 0 : i32
    return %arg0, %c0_i32, %c0_i32_0 : i32, i32, i32
  }
}

</mosaic_0001>

<llo_original>
// kernel: tpu_custom_call.1
$region0: #{tpu_custom_call.1}
  #allocation0 [shape = 'u32[]', space=smem, size = 0x4, offset = 0x4, fixed_abs, tag = 'smem constant byte address 0x4 - core index']
  #allocation1 [shape = 'u32[144,128]{1,0:T(1,128)}', space=vmem, size = 0x12000, scoped, tag = 'internal scratch']
  #allocation2 [shape = 'bf16[72,768]{1,0:T(8,128)(2,1)}', space=vmem, size = 0x1b000, scoped, tag = 'scratch operand']
  #allocation3 [shape = 'bf16[72,768]{1,0:T(8,128)(2,1)}', space=vmem, size = 0x1b000, scoped, tag = 'scratch operand']
  #allocation4 [shape = 'f32[2,8,512]{2,1,0:T(8,128)}', space=vmem, size = 0x8000, scoped, tag = 'scratch operand']
  %s0 = inlined_call_operand.hbm [shape: f32[2,8,512], index: 0, kind: input, shape index: {}]
  %s1 = inlined_call_operand.vmem [shape: bf16[8,72], index: 1, kind: input, shape index: {}]
  %s2 = inlined_call_operand.vmem [shape: f32[8,2], index: 2, kind: input, shape index: {}]
  %s3 = inlined_call_operand.vmem [shape: bf16[8,72], index: 3, kind: input, shape index: {}]
  %s4 = inlined_call_operand.vmem [shape: f32[8,2], index: 4, kind: input, shape index: {}]
  %s5 = inlined_call_operand.vmem [shape: f32[1,384], index: 5, kind: input, shape index: {}]
  %s6 = inlined_call_operand.hbm [shape: f32[2,8,384], index: 6, kind: output, shape index: {}]
  %s7 = sld [smem:[#allocation0]]
  $region38: #{tpu_custom_call.1} parent=0
    _
  %s9 = ssub.s32 1, %s7
  %s10 = scalar_select 0, %s9, %s7
  $region1: #{tpu_custom_call.1} parent=0
    #allocation5 [shape = 'u8[32768]{0}', space=vmem, size = 0x8000, scoped, tag = 'input window, operand 0, single buffered']
    #allocation6 [shape = 's32[1]{0}', space=sflag, size = 0x4, scoped, tag = 'scoped memory for tpu_custom_call.1']
    #allocation7 [shape = 's32[1]{0}', space=sflag, size = 0x4, scoped, tag = 'scoped memory for tpu_custom_call.1']
    #allocation8 [shape = 'u8[24576]{0}', space=vmem, size = 0x6000, scoped, tag = 'output window, operand 0, single buffered']
    %11 = vsyncpa [#allocation6], 0
    %12 = vsyncpa [#allocation7], 0
    // Predicated region
    $region2: #{tpu_custom_call.1} parent=1 // pred_check
      _
    $region3: #{tpu_custom_call.1} parent=1 // pred_check_branch
      %14 = sbr.rel (0) target = $region5
    $region4: #{tpu_custom_call.1} parent=1 // pred_region
      %s16 = ssub.s32 1024, 1024
      %17 = vsyncadd [#allocation6], %s16
      %s18 = sshll.u32 [#allocation5], 4
      %s19 = int_to_ptr.vmem [resolvable:$true] %s18
      %24 = dma.hbm_to_vmem [thread:$0]  %s0, 1024, %s19, [#allocation6], 512, 512, 32
    $region5: #{tpu_custom_call.1} parent=1 // pred_fallthru
      _
    // Predicated region
    $region6: #{tpu_custom_call.1} parent=1 // pred_check
      _
    $region7: #{tpu_custom_call.1} parent=1 // pred_check_branch
      %26 = sbr.rel (0) target = $region9
    $region8: #{tpu_custom_call.1} parent=1 // pred_region
      _
    $region9: #{tpu_custom_call.1} parent=1 // pred_fallthru
      _
    // Predicated region
    $region10: #{tpu_custom_call.1} parent=1 // pred_check
      _
    $region11: #{tpu_custom_call.1} parent=1 // pred_check_branch
      %28 = sbr.rel (0) target = $region13
    $region12: #{tpu_custom_call.1} parent=1 // pred_region
      _
    $region13: #{tpu_custom_call.1} parent=1 // pred_fallthru
      _
    // Predicated region
    $region14: #{tpu_custom_call.1} parent=1 // pred_check
      _
    $region15: #{tpu_custom_call.1} parent=1 // pred_check_branch
      %30 = sbr.rel (0) target = $region17
    $region16: #{tpu_custom_call.1} parent=1 // pred_region
      _
    $region17: #{tpu_custom_call.1} parent=1 // pred_fallthru
      _
    // Predicated region
    $region18: #{tpu_custom_call.1} parent=1 // pred_check
      _
    $region19: #{tpu_custom_call.1} parent=1 // pred_check_branch
      %32 = sbr.rel (0) target = $region21
    $region20: #{tpu_custom_call.1} parent=1 // pred_region
      _
    $region21: #{tpu_custom_call.1} parent=1 // pred_fallthru
      _
    // Predicated region
    $region22: #{tpu_custom_call.1} parent=1 // pred_check
      _
    $region23: #{tpu_custom_call.1} parent=1 // pred_check_branch
      %34 = sbr.rel (0) target = $region25
    $region24: #{tpu_custom_call.1} parent=1 // pred_region
      _
    $region25: #{tpu_custom_call.1} parent=1 // pred_fallthru
      _
    // Predicated region
    $region26: #{tpu_custom_call.1} parent=1 // pred_check
      _
    $region27: #{tpu_custom_call.1} parent=1 // pred_check_branch
      %36 = sbr.rel (0) target = $region29
    $region28: #{tpu_custom_call.1} parent=1 // pred_region
      %37 = dma.done [#allocation6], 1024
    $region29: #{tpu_custom_call.1} parent=1 // pred_fallthru
      _
    %v39 = vld [vmem:[%s5] sm:$0x7]
    %v40 = vld [vmem:[#allocation5] sm:$0xff]
    %v41 = vld [vmem:[#allocation5 + $0x8] sm:$0xff]
    %v42 = vld [vmem:[#allocation5 + $0x10] sm:$0xff]
    %v43 = vpack.c.bf16 %v40, %v40
    %v44 = vpack.c.bf16 %v41, %v41
    %v45 = vpack.c.bf16 %v42, %v42
    %v49 = vunpack.c.l.b16 %v43
    %v50 = vunpack.c.l.b16 %v44
    %v51 = vunpack.c.l.b16 %v45
    %v52 = vpack.c.b16 %v50, %v49
    %v53 = vpack.c.b16 %v51, %v51
    %56 = vst [vmem:[#allocation2] sm:$0xff] %v52
    %57 = vst [vmem:[#allocation2 + $0x8] sm:$0xf] %v53
    %v58 = vld [vmem:[#allocation5] sm:$0xff]
    %v59 = vld [vmem:[#allocation5 + $0x8] sm:$0xff]
    %v60 = vld [vmem:[#allocation5 + $0x10] sm:$0xff]
    %v61 = vld [vmem:[#allocation5 + $0x18] sm:$0xff]
    %v62 = vpack.c.bf16 %v58, %v58
    %v63 = vpack.c.bf16 %v59, %v59
    %v64 = vpack.c.bf16 %v60, %v60
    %v65 = vpack.c.bf16 %v61, %v61
    %v70 = vunpack.c.l.b16 %v62
    %v71 = vunpack.c.l.b16 %v63
    %v72 = vunpack.c.l.b16 %v64
    %v73 = vunpack.c.l.b16 %v65
    %v74 = vpack.c.b16 %v71, %v70
    %v75 = vpack.c.b16 %v73, %v72
    %76 = vrot.lane.b32.xlu0 %v74, 127
    %v77 = vpop.permute.xlu0 %76
    %78 = vrot.lane.b32.xlu0 %v75, 127
    %v79 = vpop.permute.xlu0 %78
    %v80 = vrot.slane %v77, 4
    %v81 = vrot.slane %v79, 4
    %vm82 = vcmask 1043456
    %v83 = vsel %vm82, %v80, %v81
    %vm84 = vcmask 1039360
    %v85 = vsel %vm84, %v77, %v83
    %v86 = vsel %vm84, %v79, %v81
    %89 = vst [vmem:[#allocation2 + $0x18] sm:$0xff] %v85
    %90 = vst [vmem:[#allocation2 + $0x20] sm:$0xf] %v86
    %v91 = vld [vmem:[#allocation5] sm:$0xff]
    %v92 = vld [vmem:[#allocation5 + $0x8] sm:$0xff]
    %v93 = vld [vmem:[#allocation5 + $0x10] sm:$0xff]
    %v94 = vld [vmem:[#allocation5 + $0x18] sm:$0xff]
    %v95 = vpack.c.bf16 %v91, %v91
    %v96 = vpack.c.bf16 %v92, %v92
    %v97 = vpack.c.bf16 %v93, %v93
    %v98 = vpack.c.bf16 %v94, %v94
    %v103 = vunpack.c.l.b16 %v95
    %v104 = vunpack.c.l.b16 %v96
    %v105 = vunpack.c.l.b16 %v97
    %v106 = vunpack.c.l.b16 %v98
    %v107 = vpack.c.b16 %v104, %v103
    %v108 = vpack.c.b16 %v106, %v105
    %109 = vrot.lane.b32.xlu0 %v107, 126
    %v110 = vpop.permute.xlu0 %109
    %111 = vrot.lane.b32.xlu0 %v108, 126
    %v112 = vpop.permute.xlu0 %111
    %v113 = vrot.slane %v110, 4
    %v114 = vrot.slane %v112, 4
    %v115 = vsel %vm82, %v113, %v114
    %vm116 = vcmask 1031168
    %v117 = vsel %vm116, %v110, %v115
    %v118 = vsel %vm116, %v112, %v114
    %121 = vst [vmem:[#allocation2 + $0x30] sm:$0xff] %v117
    %122 = vst [vmem:[#allocation2 + $0x38] sm:$0xf] %v118
    %v123 = vld [vmem:[#allocation5] sm:$0xff]
    %v124 = vld [vmem:[#allocation5 + $0x8] sm:$0xff]
    %v125 = vld [vmem:[#allocation5 + $0x10] sm:$0xff]
    %v126 = vld [vmem:[#allocation5 + $0x18] sm:$0xff]
    %v127 = vpack.c.bf16 %v123, %v123
    %v128 = vpack.c.bf16 %v124, %v124
    %v129 = vpack.c.bf16 %v125, %v125
    %v130 = vpack.c.bf16 %v126, %v126
    %v135 = vunpack.c.l.b16 %v127
    %v136 = vunpack.c.l.b16 %v128
    %v137 = vunpack.c.l.b16 %v129
    %v138 = vunpack.c.l.b16 %v130
    %v139 = vpack.c.b16 %v136, %v135
    %v140 = vpack.c.b16 %v138, %v137
    %141 = vrot.lane.b32.xlu0 %v139, 110
    %v142 = vpop.permute.xlu0 %141
    %143 = vrot.lane.b32.xlu0 %v140, 110
    %v144 = vpop.permute.xlu0 %143
    %v145 = vrot.slane %v142, 4
    %v146 = vrot.slane %v144, 4
    %v147 = vsel %vm82, %v145, %v146
    %vm148 = vcmask 900096
    %v149 = vsel %vm148, %v142, %v147
    %v150 = vsel %vm148, %v144, %v146
    %153 = vst [vmem:[#allocation2 + $0x48] sm:$0xff] %v149
    %154 = vst [vmem:[#allocation2 + $0x50] sm:$0xf] %v150
    %v155 = vld [vmem:[#allocation5] sm:$0xff]
    %v156 = vld [vmem:[#allocation5 + $0x8] sm:$0xff]
    %v157 = vld [vmem:[#allocation5 + $0x10] sm:$0xff]
    %v158 = vld [vmem:[#allocation5 + $0x18] sm:$0xff]
    %v159 = vpack.c.bf16 %v155, %v155
    %v160 = vpack.c.bf16 %v156, %v156
    %v161 = vpack.c.bf16 %v157, %v157
    %v162 = vpack.c.bf16 %v158, %v158
    %v167 = vunpack.c.l.b16 %v159
    %v168 = vunpack.c.l.b16 %v160
    %v169 = vunpack.c.l.b16 %v161
    %v170 = vunpack.c.l.b16 %v162
    %v171 = vpack.c.b16 %v168, %v167
    %v172 = vpack.c.b16 %v170, %v169
    %173 = vrot.lane.b32.xlu0 %v171, 109
    %v174 = vpop.permute.xlu0 %173
    %175 = vrot.lane.b32.xlu0 %v172, 109
    %v176 = vpop.permute.xlu0 %175
    %v177 = vrot.slane %v174, 4
    %v178 = vrot.slane %v176, 4
    %v179 = vsel %vm82, %v177, %v178
    %vm180 = vcmask 891904
    %v181 = vsel %vm180, %v174, %v179
    %v182 = vsel %vm180, %v176, %v178
    %185 = vst [vmem:[#allocation2 + $0x60] sm:$0xff] %v181
    %186 = vst [vmem:[#allocation2 + $0x68] sm:$0xf] %v182
    %v187 = vld [vmem:[#allocation5] sm:$0xff]
    %v188 = vld [vmem:[#allocation5 + $0x8] sm:$0xff]
    %v189 = vld [vmem:[#allocation5 + $0x10] sm:$0xff]
    %v190 = vld [vmem:[#allocation5 + $0x18] sm:$0xff]
    %v191 = vpack.c.bf16 %v187, %v187
    %v192 = vpack.c.bf16 %v188, %v188
    %v193 = vpack.c.bf16 %v189, %v189
    %v194 = vpack.c.bf16 %v190, %v190
    %v199 = vunpack.c.l.b16 %v191
    %v200 = vunpack.c.l.b16 %v192
    %v201 = vunpack.c.l.b16 %v193
    %v202 = vunpack.c.l.b16 %v194
    %v203 = vpack.c.b16 %v200, %v199
    %v204 = vpack.c.b16 %v202, %v201
    %205 = vrot.lane.b32.xlu0 %v203, 108
    %v206 = vpop.permute.xlu0 %205
    %207 = vrot.lane.b32.xlu0 %v204, 108
    %v208 = vpop.permute.xlu0 %207
    %v209 = vrot.slane %v206, 4
    %v210 = vrot.slane %v208, 4
    %v211 = vsel %vm82, %v209, %v210
    %vm212 = vcmask 883712
    %v213 = vsel %vm212, %v206, %v211
    %v214 = vsel %vm212, %v208, %v210
    %217 = vst [vmem:[#allocation2 + $0x78] sm:$0xff] %v213
    %218 = vst [vmem:[#allocation2 + $0x80] sm:$0xf] %v214
    %v219 = vld [vmem:[#allocation5] sm:$0xff]
    %v220 = vld [vmem:[#allocation5 + $0x8] sm:$0xff]
    %v221 = vld [vmem:[#allocation5 + $0x10] sm:$0xff]
    %v222 = vld [vmem:[#allocation5 + $0x18] sm:$0xff]
    %v223 = vpack.c.bf16 %v219, %v219
    %v224 = vpack.c.bf16 %v220, %v220
    %v225 = vpack.c.bf16 %v221, %v221
    %v226 = vpack.c.bf16 %v222, %v222
    %v231 = vunpack.c.l.b16 %v223
    %v232 = vunpack.c.l.b16 %v224
    %v233 = vunpack.c.l.b16 %v225
    %v234 = vunpack.c.l.b16 %v226
    %v235 = vpack.c.b16 %v232, %v231
    %v236 = vpack.c.b16 %v234, %v233
    %237 = vrot.lane.b32.xlu0 %v235, 92
    %v238 = vpop.permute.xlu0 %237
    %239 = vrot.lane.b32.xlu0 %v236, 92
    %v240 = vpop.permute.xlu0 %239
    %v241 = vrot.slane %v238, 4
    %v242 = vrot.slane %v240, 4
    %v243 = vsel %vm82, %v241, %v242
    %vm244 = vcmask 752640
    %v245 = vsel %vm244, %v238, %v243
    %v246 = vsel %vm244, %v240, %v242
    %249 = vst [vmem:[#allocation2 + $0x90] sm:$0xff] %v245
    %250 = vst [vmem:[#allocation2 + $0x98] sm:$0xf] %v246
    %v251 = vld [vmem:[#allocation5] sm:$0xff]
    %v252 = vld [vmem:[#allocation5 + $0x8] sm:$0xff]
    %v253 = vld [vmem:[#allocation5 + $0x10] sm:$0xff]
    %v254 = vld [vmem:[#allocation5 + $0x18] sm:$0xff]
    %v255 = vpack.c.bf16 %v251, %v251
    %v256 = vpack.c.bf16 %v252, %v252
    %v257 = vpack.c.bf16 %v253, %v253
    %v258 = vpack.c.bf16 %v254, %v254
    %v263 = vunpack.c.l.b16 %v255
    %v264 = vunpack.c.l.b16 %v256
    %v265 = vunpack.c.l.b16 %v257
    %v266 = vunpack.c.l.b16 %v258
    %v267 = vpack.c.b16 %v264, %v263
    %v268 = vpack.c.b16 %v266, %v265
    %269 = vrot.lane.b32.xlu0 %v267, 91
    %v270 = vpop.permute.xlu0 %269
    %271 = vrot.lane.b32.xlu0 %v268, 91
    %v272 = vpop.permute.xlu0 %271
    %v273 = vrot.slane %v270, 4
    %v274 = vrot.slane %v272, 4
    %v275 = vsel %vm82, %v273, %v274
    %vm276 = vcmask 744448
    %v277 = vsel %vm276, %v270, %v275
    %v278 = vsel %vm276, %v272, %v274
    %281 = vst [vmem:[#allocation2 + $0xa8] sm:$0xff] %v277
    %282 = vst [vmem:[#allocation2 + $0xb0] sm:$0xf] %v278
    %v283 = vld [vmem:[#allocation5] sm:$0xff]
    %v284 = vld [vmem:[#allocation5 + $0x8] sm:$0xff]
    %v285 = vld [vmem:[#allocation5 + $0x10] sm:$0xff]
    %v286 = vld [vmem:[#allocation5 + $0x18] sm:$0xff]
    %v287 = vpack.c.bf16 %v283, %v283
    %v288 = vpack.c.bf16 %v284, %v284
    %v289 = vpack.c.bf16 %v285, %v285
    %v290 = vpack.c.bf16 %v286, %v286
    %v295 = vunpack.c.l.b16 %v287
    %v296 = vunpack.c.l.b16 %v288
    %v297 = vunpack.c.l.b16 %v289
    %v298 = vunpack.c.l.b16 %v290
    %v299 = vpack.c.b16 %v296, %v295
    %v300 = vpack.c.b16 %v298, %v297
    %301 = vrot.lane.b32.xlu0 %v299, 90
    %v302 = vpop.permute.xlu0 %301
    %303 = vrot.lane.b32.xlu0 %v300, 90
    %v304 = vpop.permute.xlu0 %303
    %v305 = vrot.slane %v302, 4
    %v306 = vrot.slane %v304, 4
    %v307 = vsel %vm82, %v305, %v306
    %vm308 = vcmask 736256
    %v309 = vsel %vm308, %v302, %v307
    %v310 = vsel %vm308, %v304, %v306
    %313 = vst [vmem:[#allocation2 + $0xc0] sm:$0xff] %v309
    %314 = vst [vmem:[#allocation2 + $0xc8] sm:$0xf] %v310
    %s315 = scalar_lea.vmem [#allocation5], 32
    %v316 = vld [vmem:[%s315] sm:$0xff]
    %v317 = vld [vmem:[%s315 + $0x8] sm:$0xff]
    %v318 = vld [vmem:[%s315 + $0x10] sm:$0xff]
    %v319 = vpack.c.bf16 %v316, %v316
    %v320 = vpack.c.bf16 %v317, %v317
    %v321 = vpack.c.bf16 %v318, %v318
    %v325 = vunpack.c.l.b16 %v319
    %v326 = vunpack.c.l.b16 %v320
    %v327 = vunpack.c.l.b16 %v321
    %v328 = vpack.c.b16 %v326, %v325
    %v329 = vpack.c.b16 %v327, %v327
    %332 = vst [vmem:[#allocation2 + $0xc] sm:$0xff] %v328
    %333 = vst [vmem:[#allocation2 + $0x14] sm:$0xf] %v329
    %v334 = vld [vmem:[%s315] sm:$0xff]
    %v335 = vld [vmem:[%s315 + $0x8] sm:$0xff]
    %v336 = vld [vmem:[%s315 + $0x10] sm:$0xff]
    %v337 = vld [vmem:[%s315 + $0x18] sm:$0xff]
    %v338 = vpack.c.bf16 %v334, %v334
    %v339 = vpack.c.bf16 %v335, %v335
    %v340 = vpack.c.bf16 %v336, %v336
    %v341 = vpack.c.bf16 %v337, %v337
    %v346 = vunpack.c.l.b16 %v338
    %v347 = vunpack.c.l.b16 %v339
    %v348 = vunpack.c.l.b16 %v340
    %v349 = vunpack.c.l.b16 %v341
    %v350 = vpack.c.b16 %v347, %v346
    %v351 = vpack.c.b16 %v349, %v348
    %352 = vrot.lane.b32.xlu0 %v350, 127
    %v353 = vpop.permute.xlu0 %352
    %354 = vrot.lane.b32.xlu0 %v351, 127
    %v355 = vpop.permute.xlu0 %354
    %v356 = vrot.slane %v353, 4
    %v357 = vrot.slane %v355, 4
    %v358 = vsel %vm82, %v356, %v357
    %v359 = vsel %vm84, %v353, %v358
    %v360 = vsel %vm84, %v355, %v357
    %363 = vst [vmem:[#allocation2 + $0x24] sm:$0xff] %v359
    %364 = vst [vmem:[#allocation2 + $0x2c] sm:$0xf] %v360
    %v365 = vld [vmem:[%s315] sm:$0xff]
    %v366 = vld [vmem:[%s315 + $0x8] sm:$0xff]
    %v367 = vld [vmem:[%s315 + $0x10] sm:$0xff]
    %v368 = vld [vmem:[%s315 + $0x18] sm:$0xff]
    %v369 = vpack.c.bf16 %v365, %v365
    %v370 = vpack.c.bf16 %v366, %v366
    %v371 = vpack.c.bf16 %v367, %v367
    %v372 = vpack.c.bf16 %v368, %v368
    %v377 = vunpack.c.l.b16 %v369
    %v378 = vunpack.c.l.b16 %v370
    %v379 = vunpack.c.l.b16 %v371
    %v380 = vunpack.c.l.b16 %v372
    %v381 = vpack.c.b16 %v378, %v377
    %v382 = vpack.c.b16 %v380, %v379
    %383 = vrot.lane.b32.xlu0 %v381, 126
    %v384 = vpop.permute.xlu0 %383
    %385 = vrot.lane.b32.xlu0 %v382, 126
    %v386 = vpop.permute.xlu0 %385
    %v387 = vrot.slane %v384, 4
    %v388 = vrot.slane %v386, 4
    %v389 = vsel %vm82, %v387, %v388
    %v390 = vsel %vm116, %v384, %v389
    %v391 = vsel %vm116, %v386, %v388
    %394 = vst [vmem:[#allocation2 + $0x3c] sm:$0xff] %v390
    %395 = vst [vmem:[#allocation2 + $0x44] sm:$0xf] %v391
    %v396 = vld [vmem:[%s315] sm:$0xff]
    %v397 = vld [vmem:[%s315 + $0x8] sm:$0xff]
    %v398 = vld [vmem:[%s315 + $0x10] sm:$0xff]
    %v399 = vld [vmem:[%s315 + $0x18] sm:$0xff]
    %v400 = vpack.c.bf16 %v396, %v396
    %v401 = vpack.c.bf16 %v397, %v397
    %v402 = vpack.c.bf16 %v398, %v398
    %v403 = vpack.c.bf16 %v399, %v399
    %v408 = vunpack.c.l.b16 %v400
    %v409 = vunpack.c.l.b16 %v401
    %v410 = vunpack.c.l.b16 %v402
    %v411 = vunpack.c.l.b16 %v403
    %v412 = vpack.c.b16 %v409, %v408
    %v413 = vpack.c.b16 %v411, %v410
    %414 = vrot.lane.b32.xlu0 %v412, 110
    %v415 = vpop.permute.xlu0 %414
    %416 = vrot.lane.b32.xlu0 %v413, 110
    %v417 = vpop.permute.xlu0 %416
    %v418 = vrot.slane %v415, 4
    %v419 = vrot.slane %v417, 4
    %v420 = vsel %vm82, %v418, %v419
    %v421 = vsel %vm148, %v415, %v420
    %v422 = vsel %vm148, %v417, %v419
    %425 = vst [vmem:[#allocation2 + $0x54] sm:$0xff] %v421
    %426 = vst [vmem:[#allocation2 + $0x5c] sm:$0xf] %v422
    %v427 = vld [vmem:[%s315] sm:$0xff]
    %v428 = vld [vmem:[%s315 + $0x8] sm:$0xff]
    %v429 = vld [vmem:[%s315 + $0x10] sm:$0xff]
    %v430 = vld [vmem:[%s315 + $0x18] sm:$0xff]
    %v431 = vpack.c.bf16 %v427, %v427
    %v432 = vpack.c.bf16 %v428, %v428
    %v433 = vpack.c.bf16 %v429, %v429
    %v434 = vpack.c.bf16 %v430, %v430
    %v439 = vunpack.c.l.b16 %v431
    %v440 = vunpack.c.l.b16 %v432
    %v441 = vunpack.c.l.b16 %v433
    %v442 = vunpack.c.l.b16 %v434
    %v443 = vpack.c.b16 %v440, %v439
    %v444 = vpack.c.b16 %v442, %v441
    %445 = vrot.lane.b32.xlu0 %v443, 109
    %v446 = vpop.permute.xlu0 %445
    %447 = vrot.lane.b32.xlu0 %v444, 109
    %v448 = vpop.permute.xlu0 %447
    %v449 = vrot.slane %v446, 4
    %v450 = vrot.slane %v448, 4
    %v451 = vsel %vm82, %v449, %v450
    %v452 = vsel %vm180, %v446, %v451
    %v453 = vsel %vm180, %v448, %v450
    %456 = vst [vmem:[#allocation2 + $0x6c] sm:$0xff] %v452
    %457 = vst [vmem:[#allocation2 + $0x74] sm:$0xf] %v453
    %v458 = vld [vmem:[%s315] sm:$0xff]
    %v459 = vld [vmem:[%s315 + $0x8] sm:$0xff]
    %v460 = vld [vmem:[%s315 + $0x10] sm:$0xff]
    %v461 = vld [vmem:[%s315 + $0x18] sm:$0xff]
    %v462 = vpack.c.bf16 %v458, %v458
    %v463 = vpack.c.bf16 %v459, %v459
    %v464 = vpack.c.bf16 %v460, %v460
    %v465 = vpack.c.bf16 %v461, %v461
    %v470 = vunpack.c.l.b16 %v462
    %v471 = vunpack.c.l.b16 %v463
    %v472 = vunpack.c.l.b16 %v464
    %v473 = vunpack.c.l.b16 %v465
    %v474 = vpack.c.b16 %v471, %v470
    %v475 = vpack.c.b16 %v473, %v472
    %476 = vrot.lane.b32.xlu0 %v474, 108
    %v477 = vpop.permute.xlu0 %476
    %478 = vrot.lane.b32.xlu0 %v475, 108
    %v479 = vpop.permute.xlu0 %478
    %v480 = vrot.slane %v477, 4
    %v481 = vrot.slane %v479, 4
    %v482 = vsel %vm82, %v480, %v481
    %v483 = vsel %vm212, %v477, %v482
    %v484 = vsel %vm212, %v479, %v481
    %487 = vst [vmem:[#allocation2 + $0x84] sm:$0xff] %v483
    %488 = vst [vmem:[#allocation2 + $0x8c] sm:$0xf] %v484
    %v489 = vld [vmem:[%s315] sm:$0xff]
    %v490 = vld [vmem:[%s315 + $0x8] sm:$0xff]
    %v491 = vld [vmem:[%s315 + $0x10] sm:$0xff]
    %v492 = vld [vmem:[%s315 + $0x18] sm:$0xff]
    %v493 = vpack.c.bf16 %v489, %v489
    %v494 = vpack.c.bf16 %v490, %v490
    %v495 = vpack.c.bf16 %v491, %v491
    %v496 = vpack.c.bf16 %v492, %v492
    %v501 = vunpack.c.l.b16 %v493
    %v502 = vunpack.c.l.b16 %v494
    %v503 = vunpack.c.l.b16 %v495
    %v504 = vunpack.c.l.b16 %v496
    %v505 = vpack.c.b16 %v502, %v501
    %v506 = vpack.c.b16 %v504, %v503
    %507 = vrot.lane.b32.xlu0 %v505, 92
    %v508 = vpop.permute.xlu0 %507
    %509 = vrot.lane.b32.xlu0 %v506, 92
    %v510 = vpop.permute.xlu0 %509
    %v511 = vrot.slane %v508, 4
    %v512 = vrot.slane %v510, 4
    %v513 = vsel %vm82, %v511, %v512
    %v514 = vsel %vm244, %v508, %v513
    %v515 = vsel %vm244, %v510, %v512
    %518 = vst [vmem:[#allocation2 + $0x9c] sm:$0xff] %v514
    %519 = vst [vmem:[#allocation2 + $0xa4] sm:$0xf] %v515
    %v520 = vld [vmem:[%s315] sm:$0xff]
    %v521 = vld [vmem:[%s315 + $0x8] sm:$0xff]
    %v522 = vld [vmem:[%s315 + $0x10] sm:$0xff]
    %v523 = vld [vmem:[%s315 + $0x18] sm:$0xff]
    %v524 = vpack.c.bf16 %v520, %v520
    %v525 = vpack.c.bf16 %v521, %v521
    %v526 = vpack.c.bf16 %v522, %v522
    %v527 = vpack.c.bf16 %v523, %v523
    %v532 = vunpack.c.l.b16 %v524
    %v533 = vunpack.c.l.b16 %v525
    %v534 = vunpack.c.l.b16 %v526
    %v535 = vunpack.c.l.b16 %v527
    %v536 = vpack.c.b16 %v533, %v532
    %v537 = vpack.c.b16 %v535, %v534
    %538 = vrot.lane.b32.xlu0 %v536, 91
    %v539 = vpop.permute.xlu0 %538
    %540 = vrot.lane.b32.xlu0 %v537, 91
    %v541 = vpop.permute.xlu0 %540
    %v542 = vrot.slane %v539, 4
    %v543 = vrot.slane %v541, 4
    %v544 = vsel %vm82, %v542, %v543
    %v545 = vsel %vm276, %v539, %v544
    %v546 = vsel %vm276, %v541, %v543
    %549 = vst [vmem:[#allocation2 + $0xb4] sm:$0xff] %v545
    %550 = vst [vmem:[#allocation2 + $0xbc] sm:$0xf] %v546
    %v551 = vld [vmem:[%s315] sm:$0xff]
    %v552 = vld [vmem:[%s315 + $0x8] sm:$0xff]
    %v553 = vld [vmem:[%s315 + $0x10] sm:$0xff]
    %v554 = vld [vmem:[%s315 + $0x18] sm:$0xff]
    %v555 = vpack.c.bf16 %v551, %v551
    %v556 = vpack.c.bf16 %v552, %v552
    %v557 = vpack.c.bf16 %v553, %v553
    %v558 = vpack.c.bf16 %v554, %v554
    %v563 = vunpack.c.l.b16 %v555
    %v564 = vunpack.c.l.b16 %v556
    %v565 = vunpack.c.l.b16 %v557
    %v566 = vunpack.c.l.b16 %v558
    %v567 = vpack.c.b16 %v564, %v563
    %v568 = vpack.c.b16 %v566, %v565
    %569 = vrot.lane.b32.xlu0 %v567, 90
    %v570 = vpop.permute.xlu0 %569
    %571 = vrot.lane.b32.xlu0 %v568, 90
    %v572 = vpop.permute.xlu0 %571
    %v573 = vrot.slane %v570, 4
    %v574 = vrot.slane %v572, 4
    %v575 = vsel %vm82, %v573, %v574
    %v576 = vsel %vm308, %v570, %v575
    %v577 = vsel %vm308, %v572, %v574
    %580 = vst [vmem:[#allocation2 + $0xcc] sm:$0xff] %v576
    %581 = vst [vmem:[#allocation2 + $0xd4] sm:$0xf] %v577
    %v582 = vld [vmem:[%s1] sm:$0xf]
    %v583 = vld [vmem:[#allocation2] sm:$0xff]
    %v584 = vld [vmem:[#allocation2 + $0x8] sm:$0xff]
    %v585 = vld [vmem:[#allocation2 + $0x10] sm:$0xff]
    %v586 = vld [vmem:[#allocation2 + $0x18] sm:$0xff]
    %v587 = vld [vmem:[#allocation2 + $0x20] sm:$0xff]
    %v588 = vld [vmem:[#allocation2 + $0x28] sm:$0xff]
    %v589 = vld [vmem:[#allocation2 + $0x30] sm:$0xff]
    %v590 = vld [vmem:[#allocation2 + $0x38] sm:$0xff]
    %v591 = vld [vmem:[#allocation2 + $0x40] sm:$0xff]
    %v592 = vld [vmem:[#allocation2 + $0x48] sm:$0xff]
    %v593 = vld [vmem:[#allocation2 + $0x50] sm:$0xff]
    %v594 = vld [vmem:[#allocation2 + $0x58] sm:$0xff]
    %v595 = vld [vmem:[#allocation2 + $0x60] sm:$0xff]
    %v596 = vld [vmem:[#allocation2 + $0x68] sm:$0xff]
    %v597 = vld [vmem:[#allocation2 + $0x70] sm:$0xff]
    %v598 = vld [vmem:[#allocation2 + $0x78] sm:$0xff]
    %v599 = vld [vmem:[#allocation2 + $0x80] sm:$0xff]
    %v600 = vld [vmem:[#allocation2 + $0x88] sm:$0xff]
    %v601 = vld [vmem:[#allocation2 + $0x90] sm:$0xff]
    %v602 = vld [vmem:[#allocation2 + $0x98] sm:$0xff]
    %v603 = vld [vmem:[#allocation2 + $0xa0] sm:$0xff]
    %v604 = vld [vmem:[#allocation2 + $0xa8] sm:$0xff]
    %v605 = vld [vmem:[#allocation2 + $0xb0] sm:$0xff]
    %v606 = vld [vmem:[#allocation2 + $0xb8] sm:$0xff]
    %v607 = vld [vmem:[#allocation2 + $0xc0] sm:$0xff]
    %v608 = vld [vmem:[#allocation2 + $0xc8] sm:$0xff]
    %v609 = vld [vmem:[#allocation2 + $0xd0] sm:$0xff]
    %v637 = vunpack.c.l.b16 %v583
    %v638 = vunpack.c.h.b16 %v583
    %v639 = vunpack.c.l.b16 %v584
    %v640 = vunpack.c.h.b16 %v584
    %v641 = vunpack.c.l.b16 %v585
    %v642 = vunpack.c.h.b16 %v585
    %v643 = vunpack.c.l.b16 %v586
    %v644 = vunpack.c.h.b16 %v586
    %v645 = vunpack.c.l.b16 %v587
    %v646 = vunpack.c.h.b16 %v587
    %v647 = vunpack.c.l.b16 %v588
    %v648 = vunpack.c.h.b16 %v588
    %v649 = vunpack.c.l.b16 %v589
    %v650 = vunpack.c.h.b16 %v589
    %v651 = vunpack.c.l.b16 %v590
    %v652 = vunpack.c.h.b16 %v590
    %v653 = vunpack.c.l.b16 %v591
    %v654 = vunpack.c.h.b16 %v591
    %v655 = vunpack.c.l.b16 %v592
    %v656 = vunpack.c.h.b16 %v592
    %v657 = vunpack.c.l.b16 %v593
    %v658 = vunpack.c.h.b16 %v593
    %v659 = vunpack.c.l.b16 %v594
    %v660 = vunpack.c.h.b16 %v594
    %v661 = vunpack.c.l.b16 %v595
    %v662 = vunpack.c.h.b16 %v595
    %v663 = vunpack.c.l.b16 %v596
    %v664 = vunpack.c.h.b16 %v596
    %v665 = vunpack.c.l.b16 %v597
    %v666 = vunpack.c.h.b16 %v597
    %v667 = vunpack.c.l.b16 %v598
    %v668 = vunpack.c.h.b16 %v598
    %v669 = vunpack.c.l.b16 %v599
    %v670 = vunpack.c.h.b16 %v599
    %v671 = vunpack.c.l.b16 %v600
    %v672 = vunpack.c.h.b16 %v600
    %v673 = vunpack.c.l.b16 %v601
    %v674 = vunpack.c.h.b16 %v601
    %v675 = vunpack.c.l.b16 %v602
    %v676 = vunpack.c.h.b16 %v602
    %v677 = vunpack.c.l.b16 %v603
    %v678 = vunpack.c.h.b16 %v603
    %v679 = vunpack.c.l.b16 %v604
    %v680 = vunpack.c.h.b16 %v604
    %v681 = vunpack.c.l.b16 %v605
    %v682 = vunpack.c.h.b16 %v605
    %v683 = vunpack.c.l.b16 %v606
    %v684 = vunpack.c.h.b16 %v606
    %v685 = vunpack.c.l.b16 %v607
    %v686 = vunpack.c.h.b16 %v607
    %v687 = vunpack.c.l.b16 %v608
    %v688 = vunpack.c.h.b16 %v608
    %v689 = vunpack.c.l.b16 %v609
    %v690 = vunpack.c.h.b16 %v609
    %v691 = vpack.c.b16 %v643, %v637
    %v692 = vpack.c.b16 %v644, %v638
    %v693 = vpack.c.b16 %v645, %v639
    %v694 = vpack.c.b16 %v646, %v640
    %v695 = vpack.c.b16 %v647, %v641
    %v696 = vpack.c.b16 %v648, %v642
    %v697 = vpack.c.b16 %v655, %v649
    %v698 = vpack.c.b16 %v656, %v650
    %v699 = vpack.c.b16 %v657, %v651
    %v700 = vpack.c.b16 %v658, %v652
    %v701 = vpack.c.b16 %v659, %v653
    %v702 = vpack.c.b16 %v660, %v654
    %v703 = vpack.c.b16 %v667, %v661
    %v704 = vpack.c.b16 %v668, %v662
    %v705 = vpack.c.b16 %v669, %v663
    %v706 = vpack.c.b16 %v670, %v664
    %v707 = vpack.c.b16 %v671, %v665
    %v708 = vpack.c.b16 %v672, %v666
    %v709 = vpack.c.b16 %v679, %v673
    %v710 = vpack.c.b16 %v680, %v674
    %v711 = vpack.c.b16 %v681, %v675
    %v712 = vpack.c.b16 %v682, %v676
    %v713 = vpack.c.b16 %v683, %v677
    %v714 = vpack.c.b16 %v684, %v678
    %v715 = vpack.c.b16 %v685, %v685
    %v716 = vpack.c.b16 %v686, %v686
    %v717 = vpack.c.b16 %v687, %v687
    %v718 = vpack.c.b16 %v688, %v688
    %v719 = vpack.c.b16 %v689, %v689
    %v720 = vpack.c.b16 %v690, %v690
    %vm745 = vcmask 588800
    %v747 = vsel %vm745, %v582, 0
    %vm749 = vcmask 1043456
    %v751 = vsel %vm749, %v715, 0
    %v754 = vsel %vm749, %v716, 0
    %v757 = vsel %vm749, %v717, 0
    %v760 = vsel %vm749, %v718, 0
    %v763 = vsel %vm749, %v719, 0
    %v766 = vsel %vm749, %v720, 0
    %768 = vmatprep.subr.bf16.mxu0 %v692
    %769 = vmatpush1.bf16.msra.mxu0 %v691
    %770 = vmatprep.subr.bf16.mxu0 %v698
    %771 = vmatpush1.bf16.msra.mxu0 %v697
    %772 = vmatprep.subr.bf16.mxu0 %v704
    %773 = vmatpush1.bf16.msra.mxu0 %v703
    %774 = vmatprep.subr.bf16.mxu0 %v710
    %775 = vmatpush1.bf16.msra.mxu0 %v709
    %776 = vmatprep.subr.bf16.mxu0 %v754
    %777 = vmatpush1.bf16.msra.mxu0 %v751
    %778 = vmatprep.subr.bf16.mxu0 0
    %779 = vmatpush1.bf16.msra.mxu0 0
    %780 = vmatprep.subr.bf16.mxu0 0
    %781 = vmatpush1.bf16.msra.mxu0 0
    %782 = vmatprep.subr.bf16.mxu0 0
    %783 = vmatpush1.bf16.msra.mxu0 0
    %784 = vmatprep.subr.bf16.mxu0 0
    %785 = vmatpush1.bf16.msra.mxu0 0
    %786 = vmatprep.subr.bf16.mxu0 0
    %787 = vmatpush1.bf16.msra.mxu0 0
    %788 = vmatprep.subr.bf16.mxu0 0
    %789 = vmatpush1.bf16.msra.mxu0 0
    %790 = vmatprep.subr.bf16.mxu0 0
    %791 = vmatpush1.bf16.msra.mxu0 0
    %792 = vmatprep.subr.bf16.mxu0 0
    %793 = vmatpush1.bf16.msra.mxu0 0
    %794 = vmatprep.subr.bf16.mxu0 0
    %795 = vmatpush1.bf16.msra.mxu0 0
    %796 = vmatprep.subr.bf16.mxu0 0
    %797 = vmatpush1.bf16.msra.mxu0 0
    %798 = vmatprep.subr.bf16.mxu0 0
    %799 = vmatpush1.bf16.msra.mxu0 0
    %800 = vmatprep.mubr.bf16.mxu0 0
    %801 = vmatmul.mubr.bf16.gmra.mrb[0].mxu0 %v747
    %v802 = vpop.f32.mrb[0].mxu0
    %v803 = vadd.f32 0.0, %v802
    %v804 = vpop.f32.mrb[0].mxu0
    %v805 = vadd.f32 0.0, %v804
    %v806 = vpop.f32.mrb[0].mxu0
    %v807 = vpop.f32.mrb[0].mxu0
    %808 = vdwg.mxu0
    %809 = vmatprep.subr.bf16.mxu0 %v694
    %810 = vmatpush1.bf16.msra.mxu0 %v693
    %811 = vmatprep.subr.bf16.mxu0 %v700
    %812 = vmatpush1.bf16.msra.mxu0 %v699
    %813 = vmatprep.subr.bf16.mxu0 %v706
    %814 = vmatpush1.bf16.msra.mxu0 %v705
    %815 = vmatprep.subr.bf16.mxu0 %v712
    %816 = vmatpush1.bf16.msra.mxu0 %v711
    %817 = vmatprep.subr.bf16.mxu0 %v760
    %818 = vmatpush1.bf16.msra.mxu0 %v757
    %819 = vmatprep.subr.bf16.mxu0 0
    %820 = vmatpush1.bf16.msra.mxu0 0
    %821 = vmatprep.subr.bf16.mxu0 0
    %822 = vmatpush1.bf16.msra.mxu0 0
    %823 = vmatprep.subr.bf16.mxu0 0
    %824 = vmatpush1.bf16.msra.mxu0 0
    %825 = vmatprep.subr.bf16.mxu0 0
    %826 = vmatpush1.bf16.msra.mxu0 0
    %827 = vmatprep.subr.bf16.mxu0 0
    %828 = vmatpush1.bf16.msra.mxu0 0
    %829 = vmatprep.subr.bf16.mxu0 0
    %830 = vmatpush1.bf16.msra.mxu0 0
    %831 = vmatprep.subr.bf16.mxu0 0
    %832 = vmatpush1.bf16.msra.mxu0 0
    %833 = vmatprep.subr.bf16.mxu0 0
    %834 = vmatpush1.bf16.msra.mxu0 0
    %835 = vmatprep.subr.bf16.mxu0 0
    %836 = vmatpush1.bf16.msra.mxu0 0
    %837 = vmatprep.subr.bf16.mxu0 0
    %838 = vmatpush1.bf16.msra.mxu0 0
    %839 = vmatprep.subr.bf16.mxu0 0
    %840 = vmatpush1.bf16.msra.mxu0 0
    %841 = vmatprep.mubr.bf16.mxu0 0
    %842 = vmatmul.mubr.bf16.gmra.mrb[0].mxu0 %v747
    %v843 = vpop.f32.mrb[0].mxu0
    %v844 = vadd.f32 0.0, %v843
    %v845 = vpop.f32.mrb[0].mxu0
    %v846 = vadd.f32 0.0, %v845
    %v847 = vpop.f32.mrb[0].mxu0
    %v848 = vpop.f32.mrb[0].mxu0
    %849 = vdwg.mxu0
    %850 = vmatprep.subr.bf16.mxu0 %v696
    %851 = vmatpush1.bf16.msra.mxu0 %v695
    %852 = vmatprep.subr.bf16.mxu0 %v702
    %853 = vmatpush1.bf16.msra.mxu0 %v701
    %854 = vmatprep.subr.bf16.mxu0 %v708
    %855 = vmatpush1.bf16.msra.mxu0 %v707
    %856 = vmatprep.subr.bf16.mxu0 %v714
    %857 = vmatpush1.bf16.msra.mxu0 %v713
    %858 = vmatprep.subr.bf16.mxu0 %v766
    %859 = vmatpush1.bf16.msra.mxu0 %v763
    %860 = vmatprep.subr.bf16.mxu0 0
    %861 = vmatpush1.bf16.msra.mxu0 0
    %862 = vmatprep.subr.bf16.mxu0 0
    %863 = vmatpush1.bf16.msra.mxu0 0
    %864 = vmatprep.subr.bf16.mxu0 0
    %865 = vmatpush1.bf16.msra.mxu0 0
    %866 = vmatprep.subr.bf16.mxu0 0
    %867 = vmatpush1.bf16.msra.mxu0 0
    %868 = vmatprep.subr.bf16.mxu0 0
    %869 = vmatpush1.bf16.msra.mxu0 0
    %870 = vmatprep.subr.bf16.mxu0 0
    %871 = vmatpush1.bf16.msra.mxu0 0
    %872 = vmatprep.subr.bf16.mxu0 0
    %873 = vmatpush1.bf16.msra.mxu0 0
    %874 = vmatprep.subr.bf16.mxu0 0
    %875 = vmatpush1.bf16.msra.mxu0 0
    %876 = vmatprep.subr.bf16.mxu0 0
    %877 = vmatpush1.bf16.msra.mxu0 0
    %878 = vmatprep.subr.bf16.mxu0 0
    %879 = vmatpush1.bf16.msra.mxu0 0
    %880 = vmatprep.subr.bf16.mxu0 0
    %881 = vmatpush1.bf16.msra.mxu0 0
    %882 = vmatprep.mubr.bf16.mxu0 0
    %883 = vmatmul.mubr.bf16.gmra.mrb[0].mxu0 %v747
    %v884 = vpop.f32.mrb[0].mxu0
    %v885 = vadd.f32 0.0, %v884
    %v886 = vpop.f32.mrb[0].mxu0
    %v887 = vadd.f32 0.0, %v886
    %v888 = vpop.f32.mrb[0].mxu0
    %v889 = vpop.f32.mrb[0].mxu0
    %890 = vdwg.mxu0
    %v891 = vld [vmem:[%s2] sm:$0xff]
    %v893 = vlaneseq
    %v894 = vshrl.u32 %v893, 7
    %v895 = vsub.s32 0, %v894
    %v896 = vrot.slane %v39, %v895
    %v897 = vlaneseq
    %v898 = vshrl.u32 %v897, 7
    %v899 = vsub.s32 1, %v898
    %v900 = vrot.slane %v39, %v899
    %v901 = vlaneseq
    %v902 = vshrl.u32 %v901, 7
    %v903 = vsub.s32 2, %v902
    %v904 = vrot.slane %v39, %v903
    %v908 = vmul.f32 %v803, %v896
    %v909 = vmul.f32 %v805, %v900
    %v910 = vmul.f32 %v844, %v904
    %v911 = vadd.f32 %v908, %v909
    %v912 = vadd.f32 %v911, %v910
    %913 = vadd.xlane.f32.xlu0 %v912
    %v914 = vpop.xlane.xlu0 %913
    %v915 = vmul.f32 %v908, %v803
    %v916 = vmul.f32 %v909, %v805
    %v917 = vmul.f32 %v910, %v844
    %v918 = vadd.f32 %v915, %v916
    %v919 = vadd.f32 %v918, %v917
    %920 = vadd.xlane.f32.xlu0 %v919
    %v921 = vpop.xlane.xlu0 %920
    %v922 = vmul.f32 %v914, 0.00390625
    %v923 = vmul.f32 %v921, 0.00390625
    %v924 = vmul.f32 %v922, %v922
    %v925 = vsub.f32 %v923, %v924
    %v926 = vadd.f32 %v925, 1e-05
    %v927 = vrsqrt.pop %v926
    %v928 = vmul.f32 %v891, %v927
    %v929 = vmul.f32 %v922, %v928
    %931 = vrot.lane.b32.xlu0 %v929, 1
    %v932 = vpop.permute.xlu0 %931
    %v934 = vsub.f32 %v891, %v932
    %936 = vset.pattern.permute.xlu0 0
    %937 = vperm.xlu0 %936, %v928
    %v938 = vpop.permute.xlu0 %937
    %v940 = vmul.f32 %v803, %v938
    %v941 = vmul.f32 %v805, %v938
    %v942 = vmul.f32 %v844, %v938
    %944 = vset.pattern.permute.xlu0 1
    %945 = vperm.xlu0 %944, %v934
    %v946 = vpop.permute.xlu0 %945
    %v948 = vadd.f32 %v940, %v946
    %v949 = vadd.f32 %v941, %v946
    %v950 = vadd.f32 %v942, %v946
    %vm951 = vcmp.ge.f32.partialorder %v948, 0.0
    %vm952 = vcmp.ge.f32.partialorder %v949, 0.0
    %vm953 = vcmp.ge.f32.partialorder %v950, 0.0
    %v954 = vmul.f32 %v948, 0.01
    %v955 = vmul.f32 %v949, 0.01
    %v956 = vmul.f32 %v950, 0.01
    %v957 = vsel %vm951, %v948, %v954
    %v958 = vsel %vm952, %v949, %v955
    %v959 = vsel %vm953, %v950, %v956
    %vm960 = vcmask 154624
    %961 = vst.msk [vmem:[#allocation4] sm:$0xff] %vm960, 0.0
    %vm962 = vcmask 1047704
    %963 = vst.msk [vmem:[#allocation4 + $0x18] sm:$0xff] %vm962, 0.0
    %v964 = vmul.f32 %v957, %v896
    %v965 = vmul.f32 %v958, %v900
    %v966 = vmul.f32 %v959, %v904
    %970 = vrot.lane.b32.xlu0 %v964, 19
    %v971 = vpop.permute.xlu0 %970
    %972 = vrot.lane.b32.xlu0 %v965, 19
    %v973 = vpop.permute.xlu0 %972
    %974 = vrot.lane.b32.xlu0 %v966, 19
    %v975 = vpop.permute.xlu0 %974
    %v976 = vsel %vm960, %v971, %v973
    %v977 = vsel %vm960, %v973, %v975
    %982 = vst.msk [vmem:[#allocation4] sm:$0xff] %vm962, %v971
    %983 = vst [vmem:[#allocation4 + $0x8] sm:$0xff] %v976
    %984 = vst [vmem:[#allocation4 + $0x10] sm:$0xff] %v977
    %985 = vst.msk [vmem:[#allocation4 + $0x18] sm:$0xff] %vm960, %v975
    %v986 = vmul.f32 %v846, %v896
    %v987 = vmul.f32 %v885, %v900
    %v988 = vmul.f32 %v887, %v904
    %v989 = vadd.f32 %v986, %v987
    %v990 = vadd.f32 %v989, %v988
    %991 = vadd.xlane.f32.xlu0 %v990
    %v992 = vpop.xlane.xlu0 %991
    %v993 = vmul.f32 %v986, %v846
    %v994 = vmul.f32 %v987, %v885
    %v995 = vmul.f32 %v988, %v887
    %v996 = vadd.f32 %v993, %v994
    %v997 = vadd.f32 %v996, %v995
    %998 = vadd.xlane.f32.xlu0 %v997
    %v999 = vpop.xlane.xlu0 %998
    %v1000 = vmul.f32 %v992, 0.00390625
    %v1001 = vmul.f32 %v999, 0.00390625
    %v1002 = vmul.f32 %v1000, %v1000
    %v1003 = vsub.f32 %v1001, %v1002
    %v1004 = vadd.f32 %v1003, 1e-05
    %v1005 = vrsqrt.pop %v1004
    %v1006 = vmul.f32 %v891, %v1005
    %v1007 = vmul.f32 %v1000, %v1006
    %1009 = vrot.lane.b32.xlu0 %v1007, 1
    %v1010 = vpop.permute.xlu0 %1009
    %v1012 = vsub.f32 %v891, %v1010
    %1014 = vset.pattern.permute.xlu0 0
    %1015 = vperm.xlu0 %1014, %v1006
    %v1016 = vpop.permute.xlu0 %1015
    %v1018 = vmul.f32 %v846, %v1016
    %v1019 = vmul.f32 %v885, %v1016
    %v1020 = vmul.f32 %v887, %v1016
    %1022 = vset.pattern.permute.xlu0 1
    %1023 = vperm.xlu0 %1022, %v1012
    %v1024 = vpop.permute.xlu0 %1023
    %v1026 = vadd.f32 %v1018, %v1024
    %v1027 = vadd.f32 %v1019, %v1024
    %v1028 = vadd.f32 %v1020, %v1024
    %vm1029 = vcmp.ge.f32.partialorder %v1026, 0.0
    %vm1030 = vcmp.ge.f32.partialorder %v1027, 0.0
    %vm1031 = vcmp.ge.f32.partialorder %v1028, 0.0
    %v1032 = vmul.f32 %v1026, 0.01
    %v1033 = vmul.f32 %v1027, 0.01
    %v1034 = vmul.f32 %v1028, 0.01
    %v1035 = vsel %vm1029, %v1026, %v1032
    %v1036 = vsel %vm1030, %v1027, %v1033
    %v1037 = vsel %vm1031, %v1028, %v1034
    %s1038 = scalar_lea.vmem [#allocation4], 32
    %1039 = vst.msk [vmem:[%s1038] sm:$0xff] %vm960, 0.0
    %1040 = vst.msk [vmem:[%s1038 + $0x18] sm:$0xff] %vm962, 0.0
    %v1041 = vmul.f32 %v1035, %v896
    %v1042 = vmul.f32 %v1036, %v900
    %v1043 = vmul.f32 %v1037, %v904
    %1047 = vrot.lane.b32.xlu0 %v1041, 19
    %v1048 = vpop.permute.xlu0 %1047
    %1049 = vrot.lane.b32.xlu0 %v1042, 19
    %v1050 = vpop.permute.xlu0 %1049
    %1051 = vrot.lane.b32.xlu0 %v1043, 19
    %v1052 = vpop.permute.xlu0 %1051
    %v1053 = vsel %vm960, %v1048, %v1050
    %v1054 = vsel %vm960, %v1050, %v1052
    %1059 = vst.msk [vmem:[%s1038] sm:$0xff] %vm962, %v1048
    %1060 = vst [vmem:[%s1038 + $0x8] sm:$0xff] %v1053
    %1061 = vst [vmem:[%s1038 + $0x10] sm:$0xff] %v1054
    %1062 = vst.msk [vmem:[%s1038 + $0x18] sm:$0xff] %vm960, %v1052
    %v1063 = vld [vmem:[#allocation4] sm:$0xff]
    %v1064 = vld [vmem:[#allocation4 + $0x8] sm:$0xff]
    %v1065 = vld [vmem:[#allocation4 + $0x10] sm:$0xff]
    %v1066 = vpack.c.bf16 %v1063, %v1063
    %v1067 = vpack.c.bf16 %v1064, %v1064
    %v1068 = vpack.c.bf16 %v1065, %v1065
    %v1072 = vunpack.c.l.b16 %v1066
    %v1073 = vunpack.c.l.b16 %v1067
    %v1074 = vunpack.c.l.b16 %v1068
    %v1075 = vpack.c.b16 %v1073, %v1072
    %v1076 = vpack.c.b16 %v1074, %v1074
    %1079 = vst [vmem:[#allocation3] sm:$0xff] %v1075
    %1080 = vst [vmem:[#allocation3 + $0x8] sm:$0xf] %v1076
    %v1081 = vld [vmem:[#allocation4] sm:$0xff]
    %v1082 = vld [vmem:[#allocation4 + $0x8] sm:$0xff]
    %v1083 = vld [vmem:[#allocation4 + $0x10] sm:$0xff]
    %v1084 = vld [vmem:[#allocation4 + $0x18] sm:$0xff]
    %v1085 = vpack.c.bf16 %v1081, %v1081
    %v1086 = vpack.c.bf16 %v1082, %v1082
    %v1087 = vpack.c.bf16 %v1083, %v1083
    %v1088 = vpack.c.bf16 %v1084, %v1084
    %v1093 = vunpack.c.l.b16 %v1085
    %v1094 = vunpack.c.l.b16 %v1086
    %v1095 = vunpack.c.l.b16 %v1087
    %v1096 = vunpack.c.l.b16 %v1088
    %v1097 = vpack.c.b16 %v1094, %v1093
    %v1098 = vpack.c.b16 %v1096, %v1095
    %1099 = vrot.lane.b32.xlu0 %v1097, 127
    %v1100 = vpop.permute.xlu0 %1099
    %1101 = vrot.lane.b32.xlu0 %v1098, 127
    %v1102 = vpop.permute.xlu0 %1101
    %v1103 = vrot.slane %v1100, 4
    %v1104 = vrot.slane %v1102, 4
    %v1105 = vsel %vm82, %v1103, %v1104
    %v1106 = vsel %vm84, %v1100, %v1105
    %v1107 = vsel %vm84, %v1102, %v1104
    %1110 = vst [vmem:[#allocation3 + $0x18] sm:$0xff] %v1106
    %1111 = vst [vmem:[#allocation3 + $0x20] sm:$0xf] %v1107
    %v1112 = vld [vmem:[#allocation4] sm:$0xff]
    %v1113 = vld [vmem:[#allocation4 + $0x8] sm:$0xff]
    %v1114 = vld [vmem:[#allocation4 + $0x10] sm:$0xff]
    %v1115 = vld [vmem:[#allocation4 + $0x18] sm:$0xff]
    %v1116 = vpack.c.bf16 %v1112, %v1112
    %v1117 = vpack.c.bf16 %v1113, %v1113
    %v1118 = vpack.c.bf16 %v1114, %v1114
    %v1119 = vpack.c.bf16 %v1115, %v1115
    %v1124 = vunpack.c.l.b16 %v1116
    %v1125 = vunpack.c.l.b16 %v1117
    %v1126 = vunpack.c.l.b16 %v1118
    %v1127 = vunpack.c.l.b16 %v1119
    %v1128 = vpack.c.b16 %v1125, %v1124
    %v1129 = vpack.c.b16 %v1127, %v1126
    %1130 = vrot.lane.b32.xlu0 %v1128, 126
    %v1131 = vpop.permute.xlu0 %1130
    %1132 = vrot.lane.b32.xlu0 %v1129, 126
    %v1133 = vpop.permute.xlu0 %1132
    %v1134 = vrot.slane %v1131, 4
    %v1135 = vrot.slane %v1133, 4
    %v1136 = vsel %vm82, %v1134, %v1135
    %v1137 = vsel %vm116, %v1131, %v1136
    %v1138 = vsel %vm116, %v1133, %v1135
    %1141 = vst [vmem:[#allocation3 + $0x30] sm:$0xff] %v1137
    %1142 = vst [vmem:[#allocation3 + $0x38] sm:$0xf] %v1138
    %v1143 = vld [vmem:[#allocation4] sm:$0xff]
    %v1144 = vld [vmem:[#allocation4 + $0x8] sm:$0xff]
    %v1145 = vld [vmem:[#allocation4 + $0x10] sm:$0xff]
    %v1146 = vld [vmem:[#allocation4 + $0x18] sm:$0xff]
    %v1147 = vpack.c.bf16 %v1143, %v1143
    %v1148 = vpack.c.bf16 %v1144, %v1144
    %v1149 = vpack.c.bf16 %v1145, %v1145
    %v1150 = vpack.c.bf16 %v1146, %v1146
    %v1155 = vunpack.c.l.b16 %v1147
    %v1156 = vunpack.c.l.b16 %v1148
    %v1157 = vunpack.c.l.b16 %v1149
    %v1158 = vunpack.c.l.b16 %v1150
    %v1159 = vpack.c.b16 %v1156, %v1155
    %v1160 = vpack.c.b16 %v1158, %v1157
    %1161 = vrot.lane.b32.xlu0 %v1159, 110
    %v1162 = vpop.permute.xlu0 %1161
    %1163 = vrot.lane.b32.xlu0 %v1160, 110
    %v1164 = vpop.permute.xlu0 %1163
    %v1165 = vrot.slane %v1162, 4
    %v1166 = vrot.slane %v1164, 4
    %v1167 = vsel %vm82, %v1165, %v1166
    %v1168 = vsel %vm148, %v1162, %v1167
    %v1169 = vsel %vm148, %v1164, %v1166
    %1172 = vst [vmem:[#allocation3 + $0x48] sm:$0xff] %v1168
    %1173 = vst [vmem:[#allocation3 + $0x50] sm:$0xf] %v1169
    %v1174 = vld [vmem:[#allocation4] sm:$0xff]
    %v1175 = vld [vmem:[#allocation4 + $0x8] sm:$0xff]
    %v1176 = vld [vmem:[#allocation4 + $0x10] sm:$0xff]
    %v1177 = vld [vmem:[#allocation4 + $0x18] sm:$0xff]
    %v1178 = vpack.c.bf16 %v1174, %v1174
    %v1179 = vpack.c.bf16 %v1175, %v1175
    %v1180 = vpack.c.bf16 %v1176, %v1176
    %v1181 = vpack.c.bf16 %v1177, %v1177
    %v1186 = vunpack.c.l.b16 %v1178
    %v1187 = vunpack.c.l.b16 %v1179
    %v1188 = vunpack.c.l.b16 %v1180
    %v1189 = vunpack.c.l.b16 %v1181
    %v1190 = vpack.c.b16 %v1187, %v1186
    %v1191 = vpack.c.b16 %v1189, %v1188
    %1192 = vrot.lane.b32.xlu0 %v1190, 109
    %v1193 = vpop.permute.xlu0 %1192
    %1194 = vrot.lane.b32.xlu0 %v1191, 109
    %v1195 = vpop.permute.xlu0 %1194
    %v1196 = vrot.slane %v1193, 4
    %v1197 = vrot.slane %v1195, 4
    %v1198 = vsel %vm82, %v1196, %v1197
    %v1199 = vsel %vm180, %v1193, %v1198
    %v1200 = vsel %vm180, %v1195, %v1197
    %1203 = vst [vmem:[#allocation3 + $0x60] sm:$0xff] %v1199
    %1204 = vst [vmem:[#allocation3 + $0x68] sm:$0xf] %v1200
    %v1205 = vld [vmem:[#allocation4] sm:$0xff]
    %v1206 = vld [vmem:[#allocation4 + $0x8] sm:$0xff]
    %v1207 = vld [vmem:[#allocation4 + $0x10] sm:$0xff]
    %v1208 = vld [vmem:[#allocation4 + $0x18] sm:$0xff]
    %v1209 = vpack.c.bf16 %v1205, %v1205
    %v1210 = vpack.c.bf16 %v1206, %v1206
    %v1211 = vpack.c.bf16 %v1207, %v1207
    %v1212 = vpack.c.bf16 %v1208, %v1208
    %v1217 = vunpack.c.l.b16 %v1209
    %v1218 = vunpack.c.l.b16 %v1210
    %v1219 = vunpack.c.l.b16 %v1211
    %v1220 = vunpack.c.l.b16 %v1212
    %v1221 = vpack.c.b16 %v1218, %v1217
    %v1222 = vpack.c.b16 %v1220, %v1219
    %1223 = vrot.lane.b32.xlu0 %v1221, 108
    %v1224 = vpop.permute.xlu0 %1223
    %1225 = vrot.lane.b32.xlu0 %v1222, 108
    %v1226 = vpop.permute.xlu0 %1225
    %v1227 = vrot.slane %v1224, 4
    %v1228 = vrot.slane %v1226, 4
    %v1229 = vsel %vm82, %v1227, %v1228
    %v1230 = vsel %vm212, %v1224, %v1229
    %v1231 = vsel %vm212, %v1226, %v1228
    %1234 = vst [vmem:[#allocation3 + $0x78] sm:$0xff] %v1230
    %1235 = vst [vmem:[#allocation3 + $0x80] sm:$0xf] %v1231
    %v1236 = vld [vmem:[#allocation4] sm:$0xff]
    %v1237 = vld [vmem:[#allocation4 + $0x8] sm:$0xff]
    %v1238 = vld [vmem:[#allocation4 + $0x10] sm:$0xff]
    %v1239 = vld [vmem:[#allocation4 + $0x18] sm:$0xff]
    %v1240 = vpack.c.bf16 %v1236, %v1236
    %v1241 = vpack.c.bf16 %v1237, %v1237
    %v1242 = vpack.c.bf16 %v1238, %v1238
    %v1243 = vpack.c.bf16 %v1239, %v1239
    %v1248 = vunpack.c.l.b16 %v1240
    %v1249 = vunpack.c.l.b16 %v1241
    %v1250 = vunpack.c.l.b16 %v1242
    %v1251 = vunpack.c.l.b16 %v1243
    %v1252 = vpack.c.b16 %v1249, %v1248
    %v1253 = vpack.c.b16 %v1251, %v1250
    %1254 = vrot.lane.b32.xlu0 %v1252, 92
    %v1255 = vpop.permute.xlu0 %1254
    %1256 = vrot.lane.b32.xlu0 %v1253, 92
    %v1257 = vpop.permute.xlu0 %1256
    %v1258 = vrot.slane %v1255, 4
    %v1259 = vrot.slane %v1257, 4
    %v1260 = vsel %vm82, %v1258, %v1259
    %v1261 = vsel %vm244, %v1255, %v1260
    %v1262 = vsel %vm244, %v1257, %v1259
    %1265 = vst [vmem:[#allocation3 + $0x90] sm:$0xff] %v1261
    %1266 = vst [vmem:[#allocation3 + $0x98] sm:$0xf] %v1262
    %v1267 = vld [vmem:[#allocation4] sm:$0xff]
    %v1268 = vld [vmem:[#allocation4 + $0x8] sm:$0xff]
    %v1269 = vld [vmem:[#allocation4 + $0x10] sm:$0xff]
    %v1270 = vld [vmem:[#allocation4 + $0x18] sm:$0xff]
    %v1271 = vpack.c.bf16 %v1267, %v1267
    %v1272 = vpack.c.bf16 %v1268, %v1268
    %v1273 = vpack.c.bf16 %v1269, %v1269
    %v1274 = vpack.c.bf16 %v1270, %v1270
    %v1279 = vunpack.c.l.b16 %v1271
    %v1280 = vunpack.c.l.b16 %v1272
    %v1281 = vunpack.c.l.b16 %v1273
    %v1282 = vunpack.c.l.b16 %v1274
    %v1283 = vpack.c.b16 %v1280, %v1279
    %v1284 = vpack.c.b16 %v1282, %v1281
    %1285 = vrot.lane.b32.xlu0 %v1283, 91
    %v1286 = vpop.permute.xlu0 %1285
    %1287 = vrot.lane.b32.xlu0 %v1284, 91
    %v1288 = vpop.permute.xlu0 %1287
    %v1289 = vrot.slane %v1286, 4
    %v1290 = vrot.slane %v1288, 4
    %v1291 = vsel %vm82, %v1289, %v1290
    %v1292 = vsel %vm276, %v1286, %v1291
    %v1293 = vsel %vm276, %v1288, %v1290
    %1296 = vst [vmem:[#allocation3 + $0xa8] sm:$0xff] %v1292
    %1297 = vst [vmem:[#allocation3 + $0xb0] sm:$0xf] %v1293
    %v1298 = vld [vmem:[#allocation4] sm:$0xff]
    %v1299 = vld [vmem:[#allocation4 + $0x8] sm:$0xff]
    %v1300 = vld [vmem:[#allocation4 + $0x10] sm:$0xff]
    %v1301 = vld [vmem:[#allocation4 + $0x18] sm:$0xff]
    %v1302 = vpack.c.bf16 %v1298, %v1298
    %v1303 = vpack.c.bf16 %v1299, %v1299
    %v1304 = vpack.c.bf16 %v1300, %v1300
    %v1305 = vpack.c.bf16 %v1301, %v1301
    %v1310 = vunpack.c.l.b16 %v1302
    %v1311 = vunpack.c.l.b16 %v1303
    %v1312 = vunpack.c.l.b16 %v1304
    %v1313 = vunpack.c.l.b16 %v1305
    %v1314 = vpack.c.b16 %v1311, %v1310
    %v1315 = vpack.c.b16 %v1313, %v1312
    %1316 = vrot.lane.b32.xlu0 %v1314, 90
    %v1317 = vpop.permute.xlu0 %1316
    %1318 = vrot.lane.b32.xlu0 %v1315, 90
    %v1319 = vpop.permute.xlu0 %1318
    %v1320 = vrot.slane %v1317, 4
    %v1321 = vrot.slane %v1319, 4
    %v1322 = vsel %vm82, %v1320, %v1321
    %v1323 = vsel %vm308, %v1317, %v1322
    %v1324 = vsel %vm308, %v1319, %v1321
    %1327 = vst [vmem:[#allocation3 + $0xc0] sm:$0xff] %v1323
    %1328 = vst [vmem:[#allocation3 + $0xc8] sm:$0xf] %v1324
    %v1329 = vld [vmem:[%s1038] sm:$0xff]
    %v1330 = vld [vmem:[%s1038 + $0x8] sm:$0xff]
    %v1331 = vld [vmem:[%s1038 + $0x10] sm:$0xff]
    %v1332 = vpack.c.bf16 %v1329, %v1329
    %v1333 = vpack.c.bf16 %v1330, %v1330
    %v1334 = vpack.c.bf16 %v1331, %v1331
    %v1338 = vunpack.c.l.b16 %v1332
    %v1339 = vunpack.c.l.b16 %v1333
    %v1340 = vunpack.c.l.b16 %v1334
    %v1341 = vpack.c.b16 %v1339, %v1338
    %v1342 = vpack.c.b16 %v1340, %v1340
    %1345 = vst [vmem:[#allocation3 + $0xc] sm:$0xff] %v1341
    %1346 = vst [vmem:[#allocation3 + $0x14] sm:$0xf] %v1342
    %v1347 = vld [vmem:[%s1038] sm:$0xff]
    %v1348 = vld [vmem:[%s1038 + $0x8] sm:$0xff]
    %v1349 = vld [vmem:[%s1038 + $0x10] sm:$0xff]
    %v1350 = vld [vmem:[%s1038 + $0x18] sm:$0xff]
    %v1351 = vpack.c.bf16 %v1347, %v1347
    %v1352 = vpack.c.bf16 %v1348, %v1348
    %v1353 = vpack.c.bf16 %v1349, %v1349
    %v1354 = vpack.c.bf16 %v1350, %v1350
    %v1359 = vunpack.c.l.b16 %v1351
    %v1360 = vunpack.c.l.b16 %v1352
    %v1361 = vunpack.c.l.b16 %v1353
    %v1362 = vunpack.c.l.b16 %v1354
    %v1363 = vpack.c.b16 %v1360, %v1359
    %v1364 = vpack.c.b16 %v1362, %v1361
    %1365 = vrot.lane.b32.xlu0 %v1363, 127
    %v1366 = vpop.permute.xlu0 %1365
    %1367 = vrot.lane.b32.xlu0 %v1364, 127
    %v1368 = vpop.permute.xlu0 %1367
    %v1369 = vrot.slane %v1366, 4
    %v1370 = vrot.slane %v1368, 4
    %v1371 = vsel %vm82, %v1369, %v1370
    %v1372 = vsel %vm84, %v1366, %v1371
    %v1373 = vsel %vm84, %v1368, %v1370
    %1376 = vst [vmem:[#allocation3 + $0x24] sm:$0xff] %v1372
    %1377 = vst [vmem:[#allocation3 + $0x2c] sm:$0xf] %v1373
    %v1378 = vld [vmem:[%s1038] sm:$0xff]
    %v1379 = vld [vmem:[%s1038 + $0x8] sm:$0xff]
    %v1380 = vld [vmem:[%s1038 + $0x10] sm:$0xff]
    %v1381 = vld [vmem:[%s1038 + $0x18] sm:$0xff]
    %v1382 = vpack.c.bf16 %v1378, %v1378
    %v1383 = vpack.c.bf16 %v1379, %v1379
    %v1384 = vpack.c.bf16 %v1380, %v1380
    %v1385 = vpack.c.bf16 %v1381, %v1381
    %v1390 = vunpack.c.l.b16 %v1382
    %v1391 = vunpack.c.l.b16 %v1383
    %v1392 = vunpack.c.l.b16 %v1384
    %v1393 = vunpack.c.l.b16 %v1385
    %v1394 = vpack.c.b16 %v1391, %v1390
    %v1395 = vpack.c.b16 %v1393, %v1392
    %1396 = vrot.lane.b32.xlu0 %v1394, 126
    %v1397 = vpop.permute.xlu0 %1396
    %1398 = vrot.lane.b32.xlu0 %v1395, 126
    %v1399 = vpop.permute.xlu0 %1398
    %v1400 = vrot.slane %v1397, 4
    %v1401 = vrot.slane %v1399, 4
    %v1402 = vsel %vm82, %v1400, %v1401
    %v1403 = vsel %vm116, %v1397, %v1402
    %v1404 = vsel %vm116, %v1399, %v1401
    %1407 = vst [vmem:[#allocation3 + $0x3c] sm:$0xff] %v1403
    %1408 = vst [vmem:[#allocation3 + $0x44] sm:$0xf] %v1404
    %v1409 = vld [vmem:[%s1038] sm:$0xff]
    %v1410 = vld [vmem:[%s1038 + $0x8] sm:$0xff]
    %v1411 = vld [vmem:[%s1038 + $0x10] sm:$0xff]
    %v1412 = vld [vmem:[%s1038 + $0x18] sm:$0xff]
    %v1413 = vpack.c.bf16 %v1409, %v1409
    %v1414 = vpack.c.bf16 %v1410, %v1410
    %v1415 = vpack.c.bf16 %v1411, %v1411
    %v1416 = vpack.c.bf16 %v1412, %v1412
    %v1421 = vunpack.c.l.b16 %v1413
    %v1422 = vunpack.c.l.b16 %v1414
    %v1423 = vunpack.c.l.b16 %v1415
    %v1424 = vunpack.c.l.b16 %v1416
    %v1425 = vpack.c.b16 %v1422, %v1421
    %v1426 = vpack.c.b16 %v1424, %v1423
    %1427 = vrot.lane.b32.xlu0 %v1425, 110
    %v1428 = vpop.permute.xlu0 %1427
    %1429 = vrot.lane.b32.xlu0 %v1426, 110
    %v1430 = vpop.permute.xlu0 %1429
    %v1431 = vrot.slane %v1428, 4
    %v1432 = vrot.slane %v1430, 4
    %v1433 = vsel %vm82, %v1431, %v1432
    %v1434 = vsel %vm148, %v1428, %v1433
    %v1435 = vsel %vm148, %v1430, %v1432
    %1438 = vst [vmem:[#allocation3 + $0x54] sm:$0xff] %v1434
    %1439 = vst [vmem:[#allocation3 + $0x5c] sm:$0xf] %v1435
    %v1440 = vld [vmem:[%s1038] sm:$0xff]
    %v1441 = vld [vmem:[%s1038 + $0x8] sm:$0xff]
    %v1442 = vld [vmem:[%s1038 + $0x10] sm:$0xff]
    %v1443 = vld [vmem:[%s1038 + $0x18] sm:$0xff]
    %v1444 = vpack.c.bf16 %v1440, %v1440
    %v1445 = vpack.c.bf16 %v1441, %v1441
    %v1446 = vpack.c.bf16 %v1442, %v1442
    %v1447 = vpack.c.bf16 %v1443, %v1443
    %v1452 = vunpack.c.l.b16 %v1444
    %v1453 = vunpack.c.l.b16 %v1445
    %v1454 = vunpack.c.l.b16 %v1446
    %v1455 = vunpack.c.l.b16 %v1447
    %v1456 = vpack.c.b16 %v1453, %v1452
    %v1457 = vpack.c.b16 %v1455, %v1454
    %1458 = vrot.lane.b32.xlu0 %v1456, 109
    %v1459 = vpop.permute.xlu0 %1458
    %1460 = vrot.lane.b32.xlu0 %v1457, 109
    %v1461 = vpop.permute.xlu0 %1460
    %v1462 = vrot.slane %v1459, 4
    %v1463 = vrot.slane %v1461, 4
    %v1464 = vsel %vm82, %v1462, %v1463
    %v1465 = vsel %vm180, %v1459, %v1464
    %v1466 = vsel %vm180, %v1461, %v1463
    %1469 = vst [vmem:[#allocation3 + $0x6c] sm:$0xff] %v1465
    %1470 = vst [vmem:[#allocation3 + $0x74] sm:$0xf] %v1466
    %v1471 = vld [vmem:[%s1038] sm:$0xff]
    %v1472 = vld [vmem:[%s1038 + $0x8] sm:$0xff]
    %v1473 = vld [vmem:[%s1038 + $0x10] sm:$0xff]
    %v1474 = vld [vmem:[%s1038 + $0x18] sm:$0xff]
    %v1475 = vpack.c.bf16 %v1471, %v1471
    %v1476 = vpack.c.bf16 %v1472, %v1472
    %v1477 = vpack.c.bf16 %v1473, %v1473
    %v1478 = vpack.c.bf16 %v1474, %v1474
    %v1483 = vunpack.c.l.b16 %v1475
    %v1484 = vunpack.c.l.b16 %v1476
    %v1485 = vunpack.c.l.b16 %v1477
    %v1486 = vunpack.c.l.b16 %v1478
    %v1487 = vpack.c.b16 %v1484, %v1483
    %v1488 = vpack.c.b16 %v1486, %v1485
    %1489 = vrot.lane.b32.xlu0 %v1487, 108
    %v1490 = vpop.permute.xlu0 %1489
    %1491 = vrot.lane.b32.xlu0 %v1488, 108
    %v1492 = vpop.permute.xlu0 %1491
    %v1493 = vrot.slane %v1490, 4
    %v1494 = vrot.slane %v1492, 4
    %v1495 = vsel %vm82, %v1493, %v1494
    %v1496 = vsel %vm212, %v1490, %v1495
    %v1497 = vsel %vm212, %v1492, %v1494
    %1500 = vst [vmem:[#allocation3 + $0x84] sm:$0xff] %v1496
    %1501 = vst [vmem:[#allocation3 + $0x8c] sm:$0xf] %v1497
    %v1502 = vld [vmem:[%s1038] sm:$0xff]
    %v1503 = vld [vmem:[%s1038 + $0x8] sm:$0xff]
    %v1504 = vld [vmem:[%s1038 + $0x10] sm:$0xff]
    %v1505 = vld [vmem:[%s1038 + $0x18] sm:$0xff]
    %v1506 = vpack.c.bf16 %v1502, %v1502
    %v1507 = vpack.c.bf16 %v1503, %v1503
    %v1508 = vpack.c.bf16 %v1504, %v1504
    %v1509 = vpack.c.bf16 %v1505, %v1505
    %v1514 = vunpack.c.l.b16 %v1506
    %v1515 = vunpack.c.l.b16 %v1507
    %v1516 = vunpack.c.l.b16 %v1508
    %v1517 = vunpack.c.l.b16 %v1509
    %v1518 = vpack.c.b16 %v1515, %v1514
    %v1519 = vpack.c.b16 %v1517, %v1516
    %1520 = vrot.lane.b32.xlu0 %v1518, 92
    %v1521 = vpop.permute.xlu0 %1520
    %1522 = vrot.lane.b32.xlu0 %v1519, 92
    %v1523 = vpop.permute.xlu0 %1522
    %v1524 = vrot.slane %v1521, 4
    %v1525 = vrot.slane %v1523, 4
    %v1526 = vsel %vm82, %v1524, %v1525
    %v1527 = vsel %vm244, %v1521, %v1526
    %v1528 = vsel %vm244, %v1523, %v1525
    %1531 = vst [vmem:[#allocation3 + $0x9c] sm:$0xff] %v1527
    %1532 = vst [vmem:[#allocation3 + $0xa4] sm:$0xf] %v1528
    %v1533 = vld [vmem:[%s1038] sm:$0xff]
    %v1534 = vld [vmem:[%s1038 + $0x8] sm:$0xff]
    %v1535 = vld [vmem:[%s1038 + $0x10] sm:$0xff]
    %v1536 = vld [vmem:[%s1038 + $0x18] sm:$0xff]
    %v1537 = vpack.c.bf16 %v1533, %v1533
    %v1538 = vpack.c.bf16 %v1534, %v1534
    %v1539 = vpack.c.bf16 %v1535, %v1535
    %v1540 = vpack.c.bf16 %v1536, %v1536
    %v1545 = vunpack.c.l.b16 %v1537
    %v1546 = vunpack.c.l.b16 %v1538
    %v1547 = vunpack.c.l.b16 %v1539
    %v1548 = vunpack.c.l.b16 %v1540
    %v1549 = vpack.c.b16 %v1546, %v1545
    %v1550 = vpack.c.b16 %v1548, %v1547
    %1551 = vrot.lane.b32.xlu0 %v1549, 91
    %v1552 = vpop.permute.xlu0 %1551
    %1553 = vrot.lane.b32.xlu0 %v1550, 91
    %v1554 = vpop.permute.xlu0 %1553
    %v1555 = vrot.slane %v1552, 4
    %v1556 = vrot.slane %v1554, 4
    %v1557 = vsel %vm82, %v1555, %v1556
    %v1558 = vsel %vm276, %v1552, %v1557
    %v1559 = vsel %vm276, %v1554, %v1556
    %1562 = vst [vmem:[#allocation3 + $0xb4] sm:$0xff] %v1558
    %1563 = vst [vmem:[#allocation3 + $0xbc] sm:$0xf] %v1559
    %v1564 = vld [vmem:[%s1038] sm:$0xff]
    %v1565 = vld [vmem:[%s1038 + $0x8] sm:$0xff]
    %v1566 = vld [vmem:[%s1038 + $0x10] sm:$0xff]
    %v1567 = vld [vmem:[%s1038 + $0x18] sm:$0xff]
    %v1568 = vpack.c.bf16 %v1564, %v1564
    %v1569 = vpack.c.bf16 %v1565, %v1565
    %v1570 = vpack.c.bf16 %v1566, %v1566
    %v1571 = vpack.c.bf16 %v1567, %v1567
    %v1576 = vunpack.c.l.b16 %v1568
    %v1577 = vunpack.c.l.b16 %v1569
    %v1578 = vunpack.c.l.b16 %v1570
    %v1579 = vunpack.c.l.b16 %v1571
    %v1580 = vpack.c.b16 %v1577, %v1576
    %v1581 = vpack.c.b16 %v1579, %v1578
    %1582 = vrot.lane.b32.xlu0 %v1580, 90
    %v1583 = vpop.permute.xlu0 %1582
    %1584 = vrot.lane.b32.xlu0 %v1581, 90
    %v1585 = vpop.permute.xlu0 %1584
    %v1586 = vrot.slane %v1583, 4
    %v1587 = vrot.slane %v1585, 4
    %v1588 = vsel %vm82, %v1586, %v1587
    %v1589 = vsel %vm308, %v1583, %v1588
    %v1590 = vsel %vm308, %v1585, %v1587
    %1593 = vst [vmem:[#allocation3 + $0xcc] sm:$0xff] %v1589
    %1594 = vst [vmem:[#allocation3 + $0xd4] sm:$0xf] %v1590
    %v1595 = vld [vmem:[%s3] sm:$0xf]
    %v1596 = vld [vmem:[#allocation3] sm:$0xff]
    %v1597 = vld [vmem:[#allocation3 + $0x8] sm:$0xff]
    %v1598 = vld [vmem:[#allocation3 + $0x10] sm:$0xff]
    %v1599 = vld [vmem:[#allocation3 + $0x18] sm:$0xff]
    %v1600 = vld [vmem:[#allocation3 + $0x20] sm:$0xff]
    %v1601 = vld [vmem:[#allocation3 + $0x28] sm:$0xff]
    %v1602 = vld [vmem:[#allocation3 + $0x30] sm:$0xff]
    %v1603 = vld [vmem:[#allocation3 + $0x38] sm:$0xff]
    %v1604 = vld [vmem:[#allocation3 + $0x40] sm:$0xff]
    %v1605 = vld [vmem:[#allocation3 + $0x48] sm:$0xff]
    %v1606 = vld [vmem:[#allocation3 + $0x50] sm:$0xff]
    %v1607 = vld [vmem:[#allocation3 + $0x58] sm:$0xff]
    %v1608 = vld [vmem:[#allocation3 + $0x60] sm:$0xff]
    %v1609 = vld [vmem:[#allocation3 + $0x68] sm:$0xff]
    %v1610 = vld [vmem:[#allocation3 + $0x70] sm:$0xff]
    %v1611 = vld [vmem:[#allocation3 + $0x78] sm:$0xff]
    %v1612 = vld [vmem:[#allocation3 + $0x80] sm:$0xff]
    %v1613 = vld [vmem:[#allocation3 + $0x88] sm:$0xff]
    %v1614 = vld [vmem:[#allocation3 + $0x90] sm:$0xff]
    %v1615 = vld [vmem:[#allocation3 + $0x98] sm:$0xff]
    %v1616 = vld [vmem:[#allocation3 + $0xa0] sm:$0xff]
    %v1617 = vld [vmem:[#allocation3 + $0xa8] sm:$0xff]
    %v1618 = vld [vmem:[#allocation3 + $0xb0] sm:$0xff]
    %v1619 = vld [vmem:[#allocation3 + $0xb8] sm:$0xff]
    %v1620 = vld [vmem:[#allocation3 + $0xc0] sm:$0xff]
    %v1621 = vld [vmem:[#allocation3 + $0xc8] sm:$0xff]
    %v1622 = vld [vmem:[#allocation3 + $0xd0] sm:$0xff]
    %v1650 = vunpack.c.l.b16 %v1596
    %v1651 = vunpack.c.h.b16 %v1596
    %v1652 = vunpack.c.l.b16 %v1597
    %v1653 = vunpack.c.h.b16 %v1597
    %v1654 = vunpack.c.l.b16 %v1598
    %v1655 = vunpack.c.h.b16 %v1598
    %v1656 = vunpack.c.l.b16 %v1599
    %v1657 = vunpack.c.h.b16 %v1599
    %v1658 = vunpack.c.l.b16 %v1600
    %v1659 = vunpack.c.h.b16 %v1600
    %v1660 = vunpack.c.l.b16 %v1601
    %v1661 = vunpack.c.h.b16 %v1601
    %v1662 = vunpack.c.l.b16 %v1602
    %v1663 = vunpack.c.h.b16 %v1602
    %v1664 = vunpack.c.l.b16 %v1603
    %v1665 = vunpack.c.h.b16 %v1603
    %v1666 = vunpack.c.l.b16 %v1604
    %v1667 = vunpack.c.h.b16 %v1604
    %v1668 = vunpack.c.l.b16 %v1605
    %v1669 = vunpack.c.h.b16 %v1605
    %v1670 = vunpack.c.l.b16 %v1606
    %v1671 = vunpack.c.h.b16 %v1606
    %v1672 = vunpack.c.l.b16 %v1607
    %v1673 = vunpack.c.h.b16 %v1607
    %v1674 = vunpack.c.l.b16 %v1608
    %v1675 = vunpack.c.h.b16 %v1608
    %v1676 = vunpack.c.l.b16 %v1609
    %v1677 = vunpack.c.h.b16 %v1609
    %v1678 = vunpack.c.l.b16 %v1610
    %v1679 = vunpack.c.h.b16 %v1610
    %v1680 = vunpack.c.l.b16 %v1611
    %v1681 = vunpack.c.h.b16 %v1611
    %v1682 = vunpack.c.l.b16 %v1612
    %v1683 = vunpack.c.h.b16 %v1612
    %v1684 = vunpack.c.l.b16 %v1613
    %v1685 = vunpack.c.h.b16 %v1613
    %v1686 = vunpack.c.l.b16 %v1614
    %v1687 = vunpack.c.h.b16 %v1614
    %v1688 = vunpack.c.l.b16 %v1615
    %v1689 = vunpack.c.h.b16 %v1615
    %v1690 = vunpack.c.l.b16 %v1616
    %v1691 = vunpack.c.h.b16 %v1616
    %v1692 = vunpack.c.l.b16 %v1617
    %v1693 = vunpack.c.h.b16 %v1617
    %v1694 = vunpack.c.l.b16 %v1618
    %v1695 = vunpack.c.h.b16 %v1618
    %v1696 = vunpack.c.l.b16 %v1619
    %v1697 = vunpack.c.h.b16 %v1619
    %v1698 = vunpack.c.l.b16 %v1620
    %v1699 = vunpack.c.h.b16 %v1620
    %v1700 = vunpack.c.l.b16 %v1621
    %v1701 = vunpack.c.h.b16 %v1621
    %v1702 = vunpack.c.l.b16 %v1622
    %v1703 = vunpack.c.h.b16 %v1622
    %v1704 = vpack.c.b16 %v1656, %v1650
    %v1705 = vpack.c.b16 %v1657, %v1651
    %v1706 = vpack.c.b16 %v1658, %v1652
    %v1707 = vpack.c.b16 %v1659, %v1653
    %v1708 = vpack.c.b16 %v1660, %v1654
    %v1709 = vpack.c.b16 %v1661, %v1655
    %v1710 = vpack.c.b16 %v1668, %v1662
    %v1711 = vpack.c.b16 %v1669, %v1663
    %v1712 = vpack.c.b16 %v1670, %v1664
    %v1713 = vpack.c.b16 %v1671, %v1665
    %v1714 = vpack.c.b16 %v1672, %v1666
    %v1715 = vpack.c.b16 %v1673, %v1667
    %v1716 = vpack.c.b16 %v1680, %v1674
    %v1717 = vpack.c.b16 %v1681, %v1675
    %v1718 = vpack.c.b16 %v1682, %v1676
    %v1719 = vpack.c.b16 %v1683, %v1677
    %v1720 = vpack.c.b16 %v1684, %v1678
    %v1721 = vpack.c.b16 %v1685, %v1679
    %v1722 = vpack.c.b16 %v1692, %v1686
    %v1723 = vpack.c.b16 %v1693, %v1687
    %v1724 = vpack.c.b16 %v1694, %v1688
    %v1725 = vpack.c.b16 %v1695, %v1689
    %v1726 = vpack.c.b16 %v1696, %v1690
    %v1727 = vpack.c.b16 %v1697, %v1691
    %v1728 = vpack.c.b16 %v1698, %v1698
    %v1729 = vpack.c.b16 %v1699, %v1699
    %v1730 = vpack.c.b16 %v1700, %v1700
    %v1731 = vpack.c.b16 %v1701, %v1701
    %v1732 = vpack.c.b16 %v1702, %v1702
    %v1733 = vpack.c.b16 %v1703, %v1703
    %v1759 = vsel %vm745, %v1595, 0
    %v1762 = vsel %vm749, %v1728, 0
    %v1765 = vsel %vm749, %v1729, 0
    %v1768 = vsel %vm749, %v1730, 0
    %v1771 = vsel %vm749, %v1731, 0
    %v1774 = vsel %vm749, %v1732, 0
    %v1777 = vsel %vm749, %v1733, 0
    %1779 = vmatprep.subr.bf16.mxu0 %v1705
    %1780 = vmatpush1.bf16.msra.mxu0 %v1704
    %1781 = vmatprep.subr.bf16.mxu0 %v1711
    %1782 = vmatpush1.bf16.msra.mxu0 %v1710
    %1783 = vmatprep.subr.bf16.mxu0 %v1717
    %1784 = vmatpush1.bf16.msra.mxu0 %v1716
    %1785 = vmatprep.subr.bf16.mxu0 %v1723
    %1786 = vmatpush1.bf16.msra.mxu0 %v1722
    %1787 = vmatprep.subr.bf16.mxu0 %v1765
    %1788 = vmatpush1.bf16.msra.mxu0 %v1762
    %1789 = vmatprep.subr.bf16.mxu0 0
    %1790 = vmatpush1.bf16.msra.mxu0 0
    %1791 = vmatprep.subr.bf16.mxu0 0
    %1792 = vmatpush1.bf16.msra.mxu0 0
    %1793 = vmatprep.subr.bf16.mxu0 0
    %1794 = vmatpush1.bf16.msra.mxu0 0
    %1795 = vmatprep.subr.bf16.mxu0 0
    %1796 = vmatpush1.bf16.msra.mxu0 0
    %1797 = vmatprep.subr.bf16.mxu0 0
    %1798 = vmatpush1.bf16.msra.mxu0 0
    %1799 = vmatprep.subr.bf16.mxu0 0
    %1800 = vmatpush1.bf16.msra.mxu0 0
    %1801 = vmatprep.subr.bf16.mxu0 0
    %1802 = vmatpush1.bf16.msra.mxu0 0
    %1803 = vmatprep.subr.bf16.mxu0 0
    %1804 = vmatpush1.bf16.msra.mxu0 0
    %1805 = vmatprep.subr.bf16.mxu0 0
    %1806 = vmatpush1.bf16.msra.mxu0 0
    %1807 = vmatprep.subr.bf16.mxu0 0
    %1808 = vmatpush1.bf16.msra.mxu0 0
    %1809 = vmatprep.subr.bf16.mxu0 0
    %1810 = vmatpush1.bf16.msra.mxu0 0
    %1811 = vmatprep.mubr.bf16.mxu0 0
    %1812 = vmatmul.mubr.bf16.gmra.mrb[0].mxu0 %v1759
    %v1813 = vpop.f32.mrb[0].mxu0
    %v1814 = vadd.f32 0.0, %v1813
    %v1815 = vpop.f32.mrb[0].mxu0
    %v1816 = vadd.f32 0.0, %v1815
    %v1817 = vpop.f32.mrb[0].mxu0
    %v1818 = vpop.f32.mrb[0].mxu0
    %1819 = vdwg.mxu0
    %1820 = vmatprep.subr.bf16.mxu0 %v1707
    %1821 = vmatpush1.bf16.msra.mxu0 %v1706
    %1822 = vmatprep.subr.bf16.mxu0 %v1713
    %1823 = vmatpush1.bf16.msra.mxu0 %v1712
    %1824 = vmatprep.subr.bf16.mxu0 %v1719
    %1825 = vmatpush1.bf16.msra.mxu0 %v1718
    %1826 = vmatprep.subr.bf16.mxu0 %v1725
    %1827 = vmatpush1.bf16.msra.mxu0 %v1724
    %1828 = vmatprep.subr.bf16.mxu0 %v1771
    %1829 = vmatpush1.bf16.msra.mxu0 %v1768
    %1830 = vmatprep.subr.bf16.mxu0 0
    %1831 = vmatpush1.bf16.msra.mxu0 0
    %1832 = vmatprep.subr.bf16.mxu0 0
    %1833 = vmatpush1.bf16.msra.mxu0 0
    %1834 = vmatprep.subr.bf16.mxu0 0
    %1835 = vmatpush1.bf16.msra.mxu0 0
    %1836 = vmatprep.subr.bf16.mxu0 0
    %1837 = vmatpush1.bf16.msra.mxu0 0
    %1838 = vmatprep.subr.bf16.mxu0 0
    %1839 = vmatpush1.bf16.msra.mxu0 0
    %1840 = vmatprep.subr.bf16.mxu0 0
    %1841 = vmatpush1.bf16.msra.mxu0 0
    %1842 = vmatprep.subr.bf16.mxu0 0
    %1843 = vmatpush1.bf16.msra.mxu0 0
    %1844 = vmatprep.subr.bf16.mxu0 0
    %1845 = vmatpush1.bf16.msra.mxu0 0
    %1846 = vmatprep.subr.bf16.mxu0 0
    %1847 = vmatpush1.bf16.msra.mxu0 0
    %1848 = vmatprep.subr.bf16.mxu0 0
    %1849 = vmatpush1.bf16.msra.mxu0 0
    %1850 = vmatprep.subr.bf16.mxu0 0
    %1851 = vmatpush1.bf16.msra.mxu0 0
    %1852 = vmatprep.mubr.bf16.mxu0 0
    %1853 = vmatmul.mubr.bf16.gmra.mrb[0].mxu0 %v1759
    %v1854 = vpop.f32.mrb[0].mxu0
    %v1855 = vadd.f32 0.0, %v1854
    %v1856 = vpop.f32.mrb[0].mxu0
    %v1857 = vadd.f32 0.0, %v1856
    %v1858 = vpop.f32.mrb[0].mxu0
    %v1859 = vpop.f32.mrb[0].mxu0
    %1860 = vdwg.mxu0
    %1861 = vmatprep.subr.bf16.mxu0 %v1709
    %1862 = vmatpush1.bf16.msra.mxu0 %v1708
    %1863 = vmatprep.subr.bf16.mxu0 %v1715
    %1864 = vmatpush1.bf16.msra.mxu0 %v1714
    %1865 = vmatprep.subr.bf16.mxu0 %v1721
    %1866 = vmatpush1.bf16.msra.mxu0 %v1720
    %1867 = vmatprep.subr.bf16.mxu0 %v1727
    %1868 = vmatpush1.bf16.msra.mxu0 %v1726
    %1869 = vmatprep.subr.bf16.mxu0 %v1777
    %1870 = vmatpush1.bf16.msra.mxu0 %v1774
    %1871 = vmatprep.subr.bf16.mxu0 0
    %1872 = vmatpush1.bf16.msra.mxu0 0
    %1873 = vmatprep.subr.bf16.mxu0 0
    %1874 = vmatpush1.bf16.msra.mxu0 0
    %1875 = vmatprep.subr.bf16.mxu0 0
    %1876 = vmatpush1.bf16.msra.mxu0 0
    %1877 = vmatprep.subr.bf16.mxu0 0
    %1878 = vmatpush1.bf16.msra.mxu0 0
    %1879 = vmatprep.subr.bf16.mxu0 0
    %1880 = vmatpush1.bf16.msra.mxu0 0
    %1881 = vmatprep.subr.bf16.mxu0 0
    %1882 = vmatpush1.bf16.msra.mxu0 0
    %1883 = vmatprep.subr.bf16.mxu0 0
    %1884 = vmatpush1.bf16.msra.mxu0 0
    %1885 = vmatprep.subr.bf16.mxu0 0
    %1886 = vmatpush1.bf16.msra.mxu0 0
    %1887 = vmatprep.subr.bf16.mxu0 0
    %1888 = vmatpush1.bf16.msra.mxu0 0
    %1889 = vmatprep.subr.bf16.mxu0 0
    %1890 = vmatpush1.bf16.msra.mxu0 0
    %1891 = vmatprep.subr.bf16.mxu0 0
    %1892 = vmatpush1.bf16.msra.mxu0 0
    %1893 = vmatprep.mubr.bf16.mxu0 0
    %1894 = vmatmul.mubr.bf16.gmra.mrb[0].mxu0 %v1759
    %v1895 = vpop.f32.mrb[0].mxu0
    %v1896 = vadd.f32 0.0, %v1895
    %v1897 = vpop.f32.mrb[0].mxu0
    %v1898 = vadd.f32 0.0, %v1897
    %v1899 = vpop.f32.mrb[0].mxu0
    %v1900 = vpop.f32.mrb[0].mxu0
    %1901 = vdwg.mxu0
    %v1902 = vld [vmem:[%s4] sm:$0xff]
    %v1903 = vmul.f32 %v1814, %v896
    %v1904 = vmul.f32 %v1816, %v900
    %v1905 = vmul.f32 %v1855, %v904
    %v1906 = vadd.f32 %v1903, %v1904
    %v1907 = vadd.f32 %v1906, %v1905
    %1908 = vadd.xlane.f32.xlu0 %v1907
    %v1909 = vpop.xlane.xlu0 %1908
    %v1910 = vmul.f32 %v1903, %v1814
    %v1911 = vmul.f32 %v1904, %v1816
    %v1912 = vmul.f32 %v1905, %v1855
    %v1913 = vadd.f32 %v1910, %v1911
    %v1914 = vadd.f32 %v1913, %v1912
    %1915 = vadd.xlane.f32.xlu0 %v1914
    %v1916 = vpop.xlane.xlu0 %1915
    %v1917 = vmul.f32 %v1909, 0.00390625
    %v1918 = vmul.f32 %v1916, 0.00390625
    %v1919 = vmul.f32 %v1917, %v1917
    %v1920 = vsub.f32 %v1918, %v1919
    %v1921 = vadd.f32 %v1920, 1e-05
    %v1922 = vrsqrt.pop %v1921
    %v1923 = vmul.f32 %v1902, %v1922
    %v1924 = vmul.f32 %v1917, %v1923
    %1926 = vrot.lane.b32.xlu0 %v1924, 1
    %v1927 = vpop.permute.xlu0 %1926
    %v1929 = vsub.f32 %v1902, %v1927
    %1931 = vset.pattern.permute.xlu0 0
    %1932 = vperm.xlu0 %1931, %v1923
    %v1933 = vpop.permute.xlu0 %1932
    %v1935 = vmul.f32 %v1814, %v1933
    %v1936 = vmul.f32 %v1816, %v1933
    %v1937 = vmul.f32 %v1855, %v1933
    %1939 = vset.pattern.permute.xlu0 1
    %1940 = vperm.xlu0 %1939, %v1929
    %v1941 = vpop.permute.xlu0 %1940
    %v1943 = vadd.f32 %v1935, %v1941
    %v1944 = vadd.f32 %v1936, %v1941
    %v1945 = vadd.f32 %v1937, %v1941
    %vm1946 = vcmp.ge.f32.partialorder %v1943, 0.0
    %vm1947 = vcmp.ge.f32.partialorder %v1944, 0.0
    %vm1948 = vcmp.ge.f32.partialorder %v1945, 0.0
    %v1949 = vmul.f32 %v1943, 0.01
    %v1950 = vmul.f32 %v1944, 0.01
    %v1951 = vmul.f32 %v1945, 0.01
    %v1952 = vsel %vm1946, %v1943, %v1949
    %v1953 = vsel %vm1947, %v1944, %v1950
    %v1954 = vsel %vm1948, %v1945, %v1951
    %1955 = vst [vmem:[#allocation8] sm:$0xff] %v1952
    %1956 = vst [vmem:[#allocation8 + $0x8] sm:$0xff] %v1953
    %1957 = vst [vmem:[#allocation8 + $0x10] sm:$0xff] %v1954
    %v1958 = vmul.f32 %v1857, %v896
    %v1959 = vmul.f32 %v1896, %v900
    %v1960 = vmul.f32 %v1898, %v904
    %v1961 = vadd.f32 %v1958, %v1959
    %v1962 = vadd.f32 %v1961, %v1960
    %1963 = vadd.xlane.f32.xlu0 %v1962
    %v1964 = vpop.xlane.xlu0 %1963
    %v1965 = vmul.f32 %v1958, %v1857
    %v1966 = vmul.f32 %v1959, %v1896
    %v1967 = vmul.f32 %v1960, %v1898
    %v1968 = vadd.f32 %v1965, %v1966
    %v1969 = vadd.f32 %v1968, %v1967
    %1970 = vadd.xlane.f32.xlu0 %v1969
    %v1971 = vpop.xlane.xlu0 %1970
    %v1972 = vmul.f32 %v1964, 0.00390625
    %v1973 = vmul.f32 %v1971, 0.00390625
    %v1974 = vmul.f32 %v1972, %v1972
    %v1975 = vsub.f32 %v1973, %v1974
    %v1976 = vadd.f32 %v1975, 1e-05
    %v1977 = vrsqrt.pop %v1976
    %v1978 = vmul.f32 %v1902, %v1977
    %v1979 = vmul.f32 %v1972, %v1978
    %1981 = vrot.lane.b32.xlu0 %v1979, 1
    %v1982 = vpop.permute.xlu0 %1981
    %v1984 = vsub.f32 %v1902, %v1982
    %1986 = vset.pattern.permute.xlu0 0
    %1987 = vperm.xlu0 %1986, %v1978
    %v1988 = vpop.permute.xlu0 %1987
    %v1990 = vmul.f32 %v1857, %v1988
    %v1991 = vmul.f32 %v1896, %v1988
    %v1992 = vmul.f32 %v1898, %v1988
    %1994 = vset.pattern.permute.xlu0 1
    %1995 = vperm.xlu0 %1994, %v1984
    %v1996 = vpop.permute.xlu0 %1995
    %v1998 = vadd.f32 %v1990, %v1996
    %v1999 = vadd.f32 %v1991, %v1996
    %v2000 = vadd.f32 %v1992, %v1996
    %vm2001 = vcmp.ge.f32.partialorder %v1998, 0.0
    %vm2002 = vcmp.ge.f32.partialorder %v1999, 0.0
    %vm2003 = vcmp.ge.f32.partialorder %v2000, 0.0
    %v2004 = vmul.f32 %v1998, 0.01
    %v2005 = vmul.f32 %v1999, 0.01
    %v2006 = vmul.f32 %v2000, 0.01
    %v2007 = vsel %vm2001, %v1998, %v2004
    %v2008 = vsel %vm2002, %v1999, %v2005
    %v2009 = vsel %vm2003, %v2000, %v2006
    %s2010 = scalar_lea.vmem [#allocation8], 24
    %2011 = vst [vmem:[%s2010] sm:$0xff] %v2007
    %2012 = vst [vmem:[%s2010 + $0x8] sm:$0xff] %v2008
    %2013 = vst [vmem:[%s2010 + $0x10] sm:$0xff] %v2009
    // Predicated region
    $region30: #{tpu_custom_call.1} parent=1 // pred_check
      _
    $region31: #{tpu_custom_call.1} parent=1 // pred_check_branch
      %2015 = sbr.rel (0) target = $region33
    $region32: #{tpu_custom_call.1} parent=1 // pred_region
      %s2017 = ssub.s32 768, 768
      %2018 = vsyncadd [#allocation7], %s2017
      %s2019 = sshll.u32 [#allocation8], 4
      %s2020 = int_to_ptr.vmem [resolvable:$true] %s2019
      %2025 = dma.vmem_to_hbm [thread:$0]  %s2020, 768, %s6, [#allocation7], 384, 384, 24
    $region33: #{tpu_custom_call.1} parent=1 // pred_fallthru
      _
    // Predicated region
    $region34: #{tpu_custom_call.1} parent=1 // pred_check
      _
    $region35: #{tpu_custom_call.1} parent=1 // pred_check_branch
      %2027 = sbr.rel (0) target = $region37
    $region36: #{tpu_custom_call.1} parent=1 // pred_region
      %2028 = dma.done [#allocation7], 768
    $region37: #{tpu_custom_call.1} parent=1 // pred_fallthru
      _
    %2029 = vsyncpa [#allocation6], 1
    %2030 = vsyncpa [#allocation7], 1

</llo_original>
